<compile_context>
chip_gen: v7x
topology: tpu7x:2x2x1
jax: 0.10.0
libtpu: 0.0.40
codegen_flags: <defaults>
</compile_context>

<pallas_src>
import functools
import math

import jax
import jax.numpy as jnp
from jax.experimental import pallas as pl
from jax.experimental.pallas import tpu as pltpu

LN_EPS = 1e-5  # PyTorch nn.LayerNorm default


# ------------------------------ in-kernel helpers -----------------------------

def _ln(h, g, b):
    """LayerNorm over the last dim (f32 math)."""
    mean = jnp.mean(h, axis=-1, keepdims=True)
    c = h - mean
    var = jnp.mean(c * c, axis=-1, keepdims=True)
    return c * jax.lax.rsqrt(var + LN_EPS) * g + b


# ------------------------------- fused MHA block -------------------------------

def _mha_block_kernel(q_ref, kv_ref, wq_ref, bq_ref, wkv_ref, bkv_ref,
                      wo_ref, bo_ref, g1_ref, b1_ref, g2_ref, b2_ref,
                      o_ref, *, n_heads, scale):
    """One batch element per grid step.

    Computes  LN_outer(q_in + LN_mha(q_in + OutProj(Attention(q_in, kv_in, kv_in)))).
    """
    q_in = q_ref[0]                     # (Sq, D)
    kv_in = kv_ref[0]                   # (Sk, D)
    D = q_in.shape[-1]
    Hd = D // n_heads

    wq = wq_ref[...]
    wkv = wkv_ref[...]
    wo = wo_ref[...]

    # Projections (K and V fused into a single (D, 2D) matmul).
    q = jnp.dot(q_in, wq, preferred_element_type=jnp.float32) + bq_ref[...]       # (Sq, D)
    kv = jnp.dot(kv_in, wkv, preferred_element_type=jnp.float32) + bkv_ref[...]   # (Sk, 2D)
    k = kv[:, :D]
    v = kv[:, D:]

    # Per-head attention; heads live as static lane slices.  The out-projection is
    # decomposed per head (concat(o_h) @ Wo == sum_h o_h @ Wo[h*Hd:(h+1)*Hd, :]),
    # so every intermediate stays in registers and the only store is (Sq, D).
    attn = None
    for h in range(n_heads):
        sl = slice(h * Hd, (h + 1) * Hd)
        s = jax.lax.dot_general(q[:, sl], k[:, sl], (((1,), (1,)), ((), ())),
                                preferred_element_type=jnp.float32) * scale       # (Sq, Sk)
        m = jnp.max(s, axis=-1, keepdims=True)
        p = jnp.exp(s - m)
        p = p / jnp.sum(p, axis=-1, keepdims=True)
        oh = jnp.dot(p, v[:, sl], preferred_element_type=jnp.float32)             # (Sq, Hd)
        part = jnp.dot(oh, wo[sl, :], preferred_element_type=jnp.float32)         # (Sq, D)
        attn = part if attn is None else attn + part
    attn = attn + bo_ref[...]

    # Inner LayerNorm from the MultiHeadAttention module, then the decoder's outer norm.
    a = _ln(q_in + attn, g1_ref[...], b1_ref[...])
    o_ref[0] = _ln(q_in + a, g2_ref[...], b2_ref[...])


def mha_block(query_b, kv_b, p, norm_out_g, norm_out_b, n_heads):
    """Fused MHA block, batch-first layout.

    query_b: (B, Sq, D), kv_b: (B, Sk, D) -> (B, Sq, D)
    """
    B, Sq, D = query_b.shape
    Sk = kv_b.shape[1]
    Hd = D // n_heads
    kernel = functools.partial(_mha_block_kernel, n_heads=n_heads,
                               scale=1.0 / math.sqrt(Hd))

    flops = B * (4 * Sq * D * D + 4 * Sk * D * D + 4 * Sq * Sk * D)
    bytes_accessed = 4 * (2 * B * Sq * D + B * Sk * D + 4 * D * D + 8 * D)
    transcendentals = B * (n_heads * Sq * Sk + 2 * Sq)

    return pl.pallas_call(
        kernel,
        out_shape=jax.ShapeDtypeStruct((B, Sq, D), jnp.float32),
        grid=(B,),
        in_specs=[
            pl.BlockSpec((1, Sq, D), lambda b: (b, 0, 0)),      # query
            pl.BlockSpec((1, Sk, D), lambda b: (b, 0, 0)),      # key/value source
            pl.BlockSpec((D, D), lambda b: (0, 0)),             # wq
            pl.BlockSpec((1, D), lambda b: (0, 0)),             # bq
            pl.BlockSpec((D, 2 * D), lambda b: (0, 0)),         # wkv
            pl.BlockSpec((1, 2 * D), lambda b: (0, 0)),         # bkv
            pl.BlockSpec((D, D), lambda b: (0, 0)),             # wo
            pl.BlockSpec((1, D), lambda b: (0, 0)),             # bo
            pl.BlockSpec((1, D), lambda b: (0, 0)),             # inner LN gamma
            pl.BlockSpec((1, D), lambda b: (0, 0)),             # inner LN beta
            pl.BlockSpec((1, D), lambda b: (0, 0)),             # outer LN gamma
            pl.BlockSpec((1, D), lambda b: (0, 0)),             # outer LN beta
        ],
        out_specs=pl.BlockSpec((1, Sq, D), lambda b: (b, 0, 0)),
        compiler_params=pltpu.CompilerParams(dimension_semantics=("parallel",)),
        cost_estimate=pl.CostEstimate(flops=flops,
                                      transcendentals=transcendentals,
                                      bytes_accessed=bytes_accessed),
    )(query_b, kv_b, p["wq"], p["bq"], p["wkv"], p["bkv"], p["wo"], p["bo"],
      p["ln_g"], p["ln_b"], norm_out_g, norm_out_b)


# ------------------------------- fused FFN block -------------------------------

def _ffn_norm_kernel(x_ref, w1_ref, b1_ref, w2_ref, b2_ref, g_ref, bt_ref, o_ref):
    x = x_ref[...]                                                                # (TM, D)
    h = jnp.dot(x, w1_ref[...], preferred_element_type=jnp.float32) + b1_ref[...]
    h = jnp.maximum(h, 0.0)
    f = jnp.dot(h, w2_ref[...], preferred_element_type=jnp.float32) + b2_ref[...]
    o_ref[...] = _ln(x + f, g_ref[...], bt_ref[...])


def ffn_norm_block(x, w1, b1, w2, b2, g, bt):
    """LayerNorm(x + Linear(ReLU(Linear(x)))) over (M, D) rows, tiled over M."""
    M, D = x.shape
    H4 = w1.shape[1]
    TM = M if M <= 512 else 512
    assert M % TM == 0, "row count must divide the M tile"

    flops = 4 * M * D * H4
    bytes_accessed = 4 * (2 * M * D + 2 * D * H4 + H4 + 3 * D)

    return pl.pallas_call(
        _ffn_norm_kernel,
        out_shape=jax.ShapeDtypeStruct((M, D), jnp.float32),
        grid=(M // TM,),
        in_specs=[
            pl.BlockSpec((TM, D), lambda i: (i, 0)),
            pl.BlockSpec((D, H4), lambda i: (0, 0)),
            pl.BlockSpec((1, H4), lambda i: (0, 0)),
            pl.BlockSpec((H4, D), lambda i: (0, 0)),
            pl.BlockSpec((1, D), lambda i: (0, 0)),
            pl.BlockSpec((1, D), lambda i: (0, 0)),
            pl.BlockSpec((1, D), lambda i: (0, 0)),
        ],
        out_specs=pl.BlockSpec((TM, D), lambda i: (i, 0)),
        compiler_params=pltpu.CompilerParams(dimension_semantics=("parallel",)),
        cost_estimate=pl.CostEstimate(flops=flops, transcendentals=M,
                                      bytes_accessed=bytes_accessed),
    )(x, w1, b1, w2, b2, g, bt)


# ------------------------------- decoder layer ---------------------------------

def decoder_layer(x, encoder_output, params, n_heads):
    """x: (S_dec, B, D), encoder_output: (S_enc, B, D) -> (S_dec, B, D)."""
    S, B, D = x.shape

    # Single layout change to batch-first for the whole layer (and back at the end).
    xb = jnp.transpose(x, (1, 0, 2))                    # (B, S, D)
    eb = jnp.transpose(encoder_output, (1, 0, 2))       # (B, S_enc, D)

    x1 = mha_block(xb, xb, params["attn1"],
                   params["norm1_g"], params["norm1_b"], n_heads)      # self-attn
    x2 = mha_block(x1, eb, params["attn2"],
                   params["norm2_g"], params["norm2_b"], n_heads)      # cross-attn
    x3 = ffn_norm_block(x2.reshape(B * S, D),
                        params["ffn_w1"], params["ffn_b1"],
                        params["ffn_w2"], params["ffn_b2"],
                        params["norm3_g"], params["norm3_b"])

    return jnp.transpose(x3.reshape(B, S, D), (1, 0, 2))


# ------------------------------- parameter init --------------------------------

def init_mha_params(key, D):
    ks = jax.random.split(key, 8)
    s = 0.05
    f32 = jnp.float32
    wq = (jax.random.normal(ks[0], (D, D)) * s).astype(f32)
    wk = (jax.random.normal(ks[1], (D, D)) * s).astype(f32)
    wv = (jax.random.normal(ks[2], (D, D)) * s).astype(f32)
    wo = (jax.random.normal(ks[3], (D, D)) * s).astype(f32)
    bq = (jax.random.normal(ks[4], (D,)) * s).astype(f32)
    bk = (jax.random.normal(ks[5], (D,)) * s).astype(f32)
    bv = (jax.random.normal(ks[6], (D,)) * s).astype(f32)
    bo = (jax.random.normal(ks[7], (D,)) * s).astype(f32)
    return dict(
        wq=wq, bq=bq.reshape(1, D),
        wkv=jnp.concatenate([wk, wv], axis=1),                 # (D, 2D)
        bkv=jnp.concatenate([bk, bv]).reshape(1, 2 * D),
        wo=wo, bo=bo.reshape(1, D),
        ln_g=jnp.ones((1, D), f32), ln_b=jnp.zeros((1, D), f32),
    )


def init_decoder_params(key, D, n_heads):
    ks = jax.random.split(key, 6)
    s = 0.05
    f32 = jnp.float32
    return dict(
        attn1=init_mha_params(ks[0], D),
        attn2=init_mha_params(ks[1], D),
        ffn_w1=(jax.random.normal(ks[2], (D, 4 * D)) * s).astype(f32),
        ffn_b1=(jax.random.normal(ks[3], (4 * D,)) * s).astype(f32).reshape(1, 4 * D),
        ffn_w2=(jax.random.normal(ks[4], (4 * D, D)) * s).astype(f32),
        ffn_b2=(jax.random.normal(ks[5], (D,)) * s).astype(f32).reshape(1, D),
        norm1_g=jnp.ones((1, D), f32), norm1_b=jnp.zeros((1, D), f32),
        norm2_g=jnp.ones((1, D), f32), norm2_b=jnp.zeros((1, D), f32),
        norm3_g=jnp.ones((1, D), f32), norm3_b=jnp.zeros((1, D), f32),
    )


# ------------------------------ pure-JAX reference -----------------------------

def _ref_ln(h, g, b):
    mean = jnp.mean(h, axis=-1, keepdims=True)
    var = jnp.mean((h - mean) ** 2, axis=-1, keepdims=True)
    return (h - mean) * jax.lax.rsqrt(var + LN_EPS) * g + b


def _ref_mha(query, key_, value, p, n_heads):
    Sq, B, D = query.shape
    Sk = key_.shape[0]
    Hd = D // n_heads
    q = query @ p["wq"] + p["bq"]
    k = key_ @ p["wkv"][:, :D] + p["bkv"][:, :D]
    v = value @ p["wkv"][:, D:] + p["bkv"][:, D:]
    qh = q.reshape(Sq, B, n_heads, Hd)
    kh = k.reshape(Sk, B, n_heads, Hd)
    vh = v.reshape(Sk, B, n_heads, Hd)
    s = jnp.einsum("qbhd,kbhd->bhqk", qh, kh) / math.sqrt(Hd)
    a = jax.nn.softmax(s, axis=-1)
    o = jnp.einsum("bhqk,kbhd->qbhd", a, vh).reshape(Sq, B, D)
    o = o @ p["wo"] + p["bo"]
    return _ref_ln(query + o, p["ln_g"], p["ln_b"])


def _ref_decoder_layer(x, enc, params, n_heads):
    a1 = _ref_mha(x, x, x, params["attn1"], n_heads)
    x1 = _ref_ln(x + a1, params["norm1_g"], params["norm1_b"])
    a2 = _ref_mha(x1, enc, enc, params["attn2"], n_heads)
    x2 = _ref_ln(x1 + a2, params["norm2_g"], params["norm2_b"])
    h = jnp.maximum(x2 @ params["ffn_w1"] + params["ffn_b1"], 0.0)
    f = h @ params["ffn_w2"] + params["ffn_b2"]
    return _ref_ln(x2 + f, params["norm3_g"], params["norm3_b"])


# ------------------------------------ main --------------------------------------

if __name__ == "__main__":
    d_model = 128
    n_heads = 4
    S_dec, S_enc, B = 8, 16, 2

    key = jax.random.PRNGKey(0)
    kx, kenc, kp = jax.random.split(key, 3)
    x = jax.random.normal(kx, (S_dec, B, d_model), jnp.float32)
    encoder_output = jax.random.normal(kenc, (S_enc, B, d_model), jnp.float32)
    params = init_decoder_params(kp, d_model, n_heads)

    out = decoder_layer(x, encoder_output, params, n_heads)
    out = jax.block_until_ready(out)

    assert out.shape == (S_dec, B, d_model)
    ref = _ref_decoder_layer(x, encoder_output, params, n_heads)
    max_err = float(jnp.max(jnp.abs(out - ref)))
    assert jnp.allclose(out, ref, atol=2e-3, rtol=2e-3), f"max_err={max_err}"

    print("KERNEL_OK")
</pallas_src>

<mosaic_0001>
module attributes {stable_mosaic.version = 11 : i64} {
  func.func @_mha_block_kernel(%arg0: i32, %arg1: memref<1x8x128xf32, #tpu.memory_space<vmem>>, %arg2: memref<1x8x128xf32, #tpu.memory_space<vmem>>, %arg3: memref<128x128xf32, #tpu.memory_space<vmem>>, %arg4: memref<1x128xf32, #tpu.memory_space<vmem>>, %arg5: memref<128x256xf32, #tpu.memory_space<vmem>>, %arg6: memref<1x256xf32, #tpu.memory_space<vmem>>, %arg7: memref<128x128xf32, #tpu.memory_space<vmem>>, %arg8: memref<1x128xf32, #tpu.memory_space<vmem>>, %arg9: memref<1x128xf32, #tpu.memory_space<vmem>>, %arg10: memref<1x128xf32, #tpu.memory_space<vmem>>, %arg11: memref<1x128xf32, #tpu.memory_space<vmem>>, %arg12: memref<1x128xf32, #tpu.memory_space<vmem>>, %arg13: memref<1x8x128xf32, #tpu.memory_space<vmem>>) attributes {dimension_semantics = [#tpu.dimension_semantics<parallel>], iteration_bounds = array<i64: 2>, scalar_prefetch = 0 : i64, scratch_operands = 0 : i64, tpu.core_type = #tpu.core_type<tc>, window_params = [{transform_indices = @transform_0, window_bounds = array<i64: 1, 8, 128>}, {transform_indices = @transform_1, window_bounds = array<i64: 1, 8, 128>}, {pipeline_mode = #tpu.pipeline_mode<synchronous>, transform_indices = @transform_2, window_bounds = array<i64: 128, 128>}, {pipeline_mode = #tpu.pipeline_mode<synchronous>, transform_indices = @transform_3, window_bounds = array<i64: 1, 128>}, {pipeline_mode = #tpu.pipeline_mode<synchronous>, transform_indices = @transform_4, window_bounds = array<i64: 128, 256>}, {pipeline_mode = #tpu.pipeline_mode<synchronous>, transform_indices = @transform_5, window_bounds = array<i64: 1, 256>}, {pipeline_mode = #tpu.pipeline_mode<synchronous>, transform_indices = @transform_6, window_bounds = array<i64: 128, 128>}, {pipeline_mode = #tpu.pipeline_mode<synchronous>, transform_indices = @transform_7, window_bounds = array<i64: 1, 128>}, {pipeline_mode = #tpu.pipeline_mode<synchronous>, transform_indices = @transform_8, window_bounds = array<i64: 1, 128>}, {pipeline_mode = #tpu.pipeline_mode<synchronous>, transform_indices = @transform_9, window_bounds = array<i64: 1, 128>}, {pipeline_mode = #tpu.pipeline_mode<synchronous>, transform_indices = @transform_10, window_bounds = array<i64: 1, 128>}, {pipeline_mode = #tpu.pipeline_mode<synchronous>, transform_indices = @transform_11, window_bounds = array<i64: 1, 128>}, {transform_indices = @transform_12, window_bounds = array<i64: 1, 8, 128>}]} {
    %c0 = arith.constant 0 : index
    %c0_0 = arith.constant 0 : index
    %c0_1 = arith.constant 0 : index
    %0 = vector.load %arg1[%c0, %c0_0, %c0_1] : memref<1x8x128xf32, #tpu.memory_space<vmem>>, vector<1x8x128xf32>
    %1 = vector.shape_cast %0 : vector<1x8x128xf32> to vector<8x128xf32>
    %c0_2 = arith.constant 0 : index
    %c0_3 = arith.constant 0 : index
    %c0_4 = arith.constant 0 : index
    %2 = vector.load %arg2[%c0_2, %c0_3, %c0_4] : memref<1x8x128xf32, #tpu.memory_space<vmem>>, vector<1x8x128xf32>
    %3 = vector.shape_cast %2 : vector<1x8x128xf32> to vector<8x128xf32>
    %c0_5 = arith.constant 0 : index
    %c0_6 = arith.constant 0 : index
    %4 = vector.load %arg3[%c0_5, %c0_6] : memref<128x128xf32, #tpu.memory_space<vmem>>, vector<128x128xf32>
    %c0_7 = arith.constant 0 : index
    %c0_8 = arith.constant 0 : index
    %5 = vector.load %arg5[%c0_7, %c0_8] : memref<128x256xf32, #tpu.memory_space<vmem>>, vector<128x256xf32>
    %c0_9 = arith.constant 0 : index
    %c0_10 = arith.constant 0 : index
    %6 = vector.load %arg7[%c0_9, %c0_10] : memref<128x128xf32, #tpu.memory_space<vmem>>, vector<128x128xf32>
    %cst = arith.constant dense<0.000000e+00> : vector<8x128xf32>
    %7 = tpu.matmul %1, %4, %cst {dimension_numbers = #tpu.dot_dimension_numbers<[1], [0], [0], [1], [0, 0, 1, 1], [], []>} : vector<8x128xf32>, vector<128x128xf32>, vector<8x128xf32> -> vector<8x128xf32>
    %c0_11 = arith.constant 0 : index
    %c0_12 = arith.constant 0 : index
    %8 = vector.load %arg4[%c0_11, %c0_12] : memref<1x128xf32, #tpu.memory_space<vmem>>, vector<1x128xf32>
    %9 = vector.broadcast %8 : vector<1x128xf32> to vector<8x128xf32>
    %10 = arith.addf %7, %9 : vector<8x128xf32>
    %cst_13 = arith.constant dense<0.000000e+00> : vector<8x256xf32>
    %11 = tpu.matmul %3, %5, %cst_13 {dimension_numbers = #tpu.dot_dimension_numbers<[1], [0], [0], [1], [0, 0, 1, 1], [], []>} : vector<8x128xf32>, vector<128x256xf32>, vector<8x256xf32> -> vector<8x256xf32>
    %c0_14 = arith.constant 0 : index
    %c0_15 = arith.constant 0 : index
    %12 = vector.load %arg6[%c0_14, %c0_15] : memref<1x256xf32, #tpu.memory_space<vmem>>, vector<1x256xf32>
    %13 = vector.broadcast %12 : vector<1x256xf32> to vector<8x256xf32>
    %14 = arith.addf %11, %13 : vector<8x256xf32>
    %15 = vector.extract_strided_slice %14 {offsets = [0, 0], sizes = [8, 128], strides = [1, 1]} : vector<8x256xf32> to vector<8x128xf32>
    %16 = vector.extract_strided_slice %14 {offsets = [0, 128], sizes = [8, 128], strides = [1, 1]} : vector<8x256xf32> to vector<8x128xf32>
    %17 = vector.extract_strided_slice %10 {offsets = [0, 0], sizes = [8, 32], strides = [1, 1]} : vector<8x128xf32> to vector<8x32xf32>
    %18 = vector.extract_strided_slice %15 {offsets = [0, 0], sizes = [8, 32], strides = [1, 1]} : vector<8x128xf32> to vector<8x32xf32>
    %cst_16 = arith.constant dense<0.000000e+00> : vector<8x8xf32>
    %19 = tpu.matmul %17, %18, %cst_16 {dimension_numbers = #tpu.dot_dimension_numbers<[1], [1], [0], [0], [0, 0, 1, 0], [], []>} : vector<8x32xf32>, vector<8x32xf32>, vector<8x8xf32> -> vector<8x8xf32>
    %cst_17 = arith.constant 0.176776692 : f32
    %20 = vector.broadcast %cst_17 : f32 to vector<8x8xf32>
    %21 = arith.mulf %19, %20 : vector<8x8xf32>
    %cst_18 = arith.constant dense<0xFF800000> : vector<8xf32>
    %22 = vector.multi_reduction <maximumf>, %21, %cst_18 [1] : vector<8x8xf32> to vector<8xf32>
    %23 = vector.shape_cast %22 : vector<8xf32> to vector<8x1xf32>
    %24 = vector.broadcast %23 : vector<8x1xf32> to vector<8x8xf32>
    %25 = arith.subf %21, %24 : vector<8x8xf32>
    %26 = math.exp %25 : vector<8x8xf32>
    %cst_19 = arith.constant dense<0.000000e+00> : vector<8xf32>
    %27 = vector.multi_reduction <add>, %26, %cst_19 [1] : vector<8x8xf32> to vector<8xf32>
    %28 = vector.shape_cast %27 : vector<8xf32> to vector<8x1xf32>
    %29 = vector.broadcast %28 : vector<8x1xf32> to vector<8x8xf32>
    %30 = arith.divf %26, %29 : vector<8x8xf32>
    %31 = vector.extract_strided_slice %16 {offsets = [0, 0], sizes = [8, 32], strides = [1, 1]} : vector<8x128xf32> to vector<8x32xf32>
    %cst_20 = arith.constant dense<0.000000e+00> : vector<8x32xf32>
    %32 = tpu.matmul %30, %31, %cst_20 {dimension_numbers = #tpu.dot_dimension_numbers<[1], [0], [0], [1], [0, 0, 1, 1], [], []>} : vector<8x8xf32>, vector<8x32xf32>, vector<8x32xf32> -> vector<8x32xf32>
    %33 = vector.extract_strided_slice %6 {offsets = [0, 0], sizes = [32, 128], strides = [1, 1]} : vector<128x128xf32> to vector<32x128xf32>
    %cst_21 = arith.constant dense<0.000000e+00> : vector<8x128xf32>
    %34 = tpu.matmul %32, %33, %cst_21 {dimension_numbers = #tpu.dot_dimension_numbers<[1], [0], [0], [1], [0, 0, 1, 1], [], []>} : vector<8x32xf32>, vector<32x128xf32>, vector<8x128xf32> -> vector<8x128xf32>
    %35 = vector.extract_strided_slice %10 {offsets = [0, 32], sizes = [8, 32], strides = [1, 1]} : vector<8x128xf32> to vector<8x32xf32>
    %36 = vector.extract_strided_slice %15 {offsets = [0, 32], sizes = [8, 32], strides = [1, 1]} : vector<8x128xf32> to vector<8x32xf32>
    %cst_22 = arith.constant dense<0.000000e+00> : vector<8x8xf32>
    %37 = tpu.matmul %35, %36, %cst_22 {dimension_numbers = #tpu.dot_dimension_numbers<[1], [1], [0], [0], [0, 0, 1, 0], [], []>} : vector<8x32xf32>, vector<8x32xf32>, vector<8x8xf32> -> vector<8x8xf32>
    %cst_23 = arith.constant 0.176776692 : f32
    %38 = vector.broadcast %cst_23 : f32 to vector<8x8xf32>
    %39 = arith.mulf %37, %38 : vector<8x8xf32>
    %cst_24 = arith.constant dense<0xFF800000> : vector<8xf32>
    %40 = vector.multi_reduction <maximumf>, %39, %cst_24 [1] : vector<8x8xf32> to vector<8xf32>
    %41 = vector.shape_cast %40 : vector<8xf32> to vector<8x1xf32>
    %42 = vector.broadcast %41 : vector<8x1xf32> to vector<8x8xf32>
    %43 = arith.subf %39, %42 : vector<8x8xf32>
    %44 = math.exp %43 : vector<8x8xf32>
    %cst_25 = arith.constant dense<0.000000e+00> : vector<8xf32>
    %45 = vector.multi_reduction <add>, %44, %cst_25 [1] : vector<8x8xf32> to vector<8xf32>
    %46 = vector.shape_cast %45 : vector<8xf32> to vector<8x1xf32>
    %47 = vector.broadcast %46 : vector<8x1xf32> to vector<8x8xf32>
    %48 = arith.divf %44, %47 : vector<8x8xf32>
    %49 = vector.extract_strided_slice %16 {offsets = [0, 32], sizes = [8, 32], strides = [1, 1]} : vector<8x128xf32> to vector<8x32xf32>
    %cst_26 = arith.constant dense<0.000000e+00> : vector<8x32xf32>
    %50 = tpu.matmul %48, %49, %cst_26 {dimension_numbers = #tpu.dot_dimension_numbers<[1], [0], [0], [1], [0, 0, 1, 1], [], []>} : vector<8x8xf32>, vector<8x32xf32>, vector<8x32xf32> -> vector<8x32xf32>
    %51 = vector.extract_strided_slice %6 {offsets = [32, 0], sizes = [32, 128], strides = [1, 1]} : vector<128x128xf32> to vector<32x128xf32>
    %cst_27 = arith.constant dense<0.000000e+00> : vector<8x128xf32>
    %52 = tpu.matmul %50, %51, %cst_27 {dimension_numbers = #tpu.dot_dimension_numbers<[1], [0], [0], [1], [0, 0, 1, 1], [], []>} : vector<8x32xf32>, vector<32x128xf32>, vector<8x128xf32> -> vector<8x128xf32>
    %53 = arith.addf %34, %52 : vector<8x128xf32>
    %54 = vector.extract_strided_slice %10 {offsets = [0, 64], sizes = [8, 32], strides = [1, 1]} : vector<8x128xf32> to vector<8x32xf32>
    %55 = vector.extract_strided_slice %15 {offsets = [0, 64], sizes = [8, 32], strides = [1, 1]} : vector<8x128xf32> to vector<8x32xf32>
    %cst_28 = arith.constant dense<0.000000e+00> : vector<8x8xf32>
    %56 = tpu.matmul %54, %55, %cst_28 {dimension_numbers = #tpu.dot_dimension_numbers<[1], [1], [0], [0], [0, 0, 1, 0], [], []>} : vector<8x32xf32>, vector<8x32xf32>, vector<8x8xf32> -> vector<8x8xf32>
    %cst_29 = arith.constant 0.176776692 : f32
    %57 = vector.broadcast %cst_29 : f32 to vector<8x8xf32>
    %58 = arith.mulf %56, %57 : vector<8x8xf32>
    %cst_30 = arith.constant dense<0xFF800000> : vector<8xf32>
    %59 = vector.multi_reduction <maximumf>, %58, %cst_30 [1] : vector<8x8xf32> to vector<8xf32>
    %60 = vector.shape_cast %59 : vector<8xf32> to vector<8x1xf32>
    %61 = vector.broadcast %60 : vector<8x1xf32> to vector<8x8xf32>
    %62 = arith.subf %58, %61 : vector<8x8xf32>
    %63 = math.exp %62 : vector<8x8xf32>
    %cst_31 = arith.constant dense<0.000000e+00> : vector<8xf32>
    %64 = vector.multi_reduction <add>, %63, %cst_31 [1] : vector<8x8xf32> to vector<8xf32>
    %65 = vector.shape_cast %64 : vector<8xf32> to vector<8x1xf32>
    %66 = vector.broadcast %65 : vector<8x1xf32> to vector<8x8xf32>
    %67 = arith.divf %63, %66 : vector<8x8xf32>
    %68 = vector.extract_strided_slice %16 {offsets = [0, 64], sizes = [8, 32], strides = [1, 1]} : vector<8x128xf32> to vector<8x32xf32>
    %cst_32 = arith.constant dense<0.000000e+00> : vector<8x32xf32>
    %69 = tpu.matmul %67, %68, %cst_32 {dimension_numbers = #tpu.dot_dimension_numbers<[1], [0], [0], [1], [0, 0, 1, 1], [], []>} : vector<8x8xf32>, vector<8x32xf32>, vector<8x32xf32> -> vector<8x32xf32>
    %70 = vector.extract_strided_slice %6 {offsets = [64, 0], sizes = [32, 128], strides = [1, 1]} : vector<128x128xf32> to vector<32x128xf32>
    %cst_33 = arith.constant dense<0.000000e+00> : vector<8x128xf32>
    %71 = tpu.matmul %69, %70, %cst_33 {dimension_numbers = #tpu.dot_dimension_numbers<[1], [0], [0], [1], [0, 0, 1, 1], [], []>} : vector<8x32xf32>, vector<32x128xf32>, vector<8x128xf32> -> vector<8x128xf32>
    %72 = arith.addf %53, %71 : vector<8x128xf32>
    %73 = vector.extract_strided_slice %10 {offsets = [0, 96], sizes = [8, 32], strides = [1, 1]} : vector<8x128xf32> to vector<8x32xf32>
    %74 = vector.extract_strided_slice %15 {offsets = [0, 96], sizes = [8, 32], strides = [1, 1]} : vector<8x128xf32> to vector<8x32xf32>
    %cst_34 = arith.constant dense<0.000000e+00> : vector<8x8xf32>
    %75 = tpu.matmul %73, %74, %cst_34 {dimension_numbers = #tpu.dot_dimension_numbers<[1], [1], [0], [0], [0, 0, 1, 0], [], []>} : vector<8x32xf32>, vector<8x32xf32>, vector<8x8xf32> -> vector<8x8xf32>
    %cst_35 = arith.constant 0.176776692 : f32
    %76 = vector.broadcast %cst_35 : f32 to vector<8x8xf32>
    %77 = arith.mulf %75, %76 : vector<8x8xf32>
    %cst_36 = arith.constant dense<0xFF800000> : vector<8xf32>
    %78 = vector.multi_reduction <maximumf>, %77, %cst_36 [1] : vector<8x8xf32> to vector<8xf32>
    %79 = vector.shape_cast %78 : vector<8xf32> to vector<8x1xf32>
    %80 = vector.broadcast %79 : vector<8x1xf32> to vector<8x8xf32>
    %81 = arith.subf %77, %80 : vector<8x8xf32>
    %82 = math.exp %81 : vector<8x8xf32>
    %cst_37 = arith.constant dense<0.000000e+00> : vector<8xf32>
    %83 = vector.multi_reduction <add>, %82, %cst_37 [1] : vector<8x8xf32> to vector<8xf32>
    %84 = vector.shape_cast %83 : vector<8xf32> to vector<8x1xf32>
    %85 = vector.broadcast %84 : vector<8x1xf32> to vector<8x8xf32>
    %86 = arith.divf %82, %85 : vector<8x8xf32>
    %87 = vector.extract_strided_slice %16 {offsets = [0, 96], sizes = [8, 32], strides = [1, 1]} : vector<8x128xf32> to vector<8x32xf32>
    %cst_38 = arith.constant dense<0.000000e+00> : vector<8x32xf32>
    %88 = tpu.matmul %86, %87, %cst_38 {dimension_numbers = #tpu.dot_dimension_numbers<[1], [0], [0], [1], [0, 0, 1, 1], [], []>} : vector<8x8xf32>, vector<8x32xf32>, vector<8x32xf32> -> vector<8x32xf32>
    %89 = vector.extract_strided_slice %6 {offsets = [96, 0], sizes = [32, 128], strides = [1, 1]} : vector<128x128xf32> to vector<32x128xf32>
    %cst_39 = arith.constant dense<0.000000e+00> : vector<8x128xf32>
    %90 = tpu.matmul %88, %89, %cst_39 {dimension_numbers = #tpu.dot_dimension_numbers<[1], [0], [0], [1], [0, 0, 1, 1], [], []>} : vector<8x32xf32>, vector<32x128xf32>, vector<8x128xf32> -> vector<8x128xf32>
    %91 = arith.addf %72, %90 : vector<8x128xf32>
    %c0_40 = arith.constant 0 : index
    %c0_41 = arith.constant 0 : index
    %92 = vector.load %arg8[%c0_40, %c0_41] : memref<1x128xf32, #tpu.memory_space<vmem>>, vector<1x128xf32>
    %93 = vector.broadcast %92 : vector<1x128xf32> to vector<8x128xf32>
    %94 = arith.addf %91, %93 : vector<8x128xf32>
    %95 = arith.addf %1, %94 : vector<8x128xf32>
    %c0_42 = arith.constant 0 : index
    %c0_43 = arith.constant 0 : index
    %96 = vector.load %arg9[%c0_42, %c0_43] : memref<1x128xf32, #tpu.memory_space<vmem>>, vector<1x128xf32>
    %c0_44 = arith.constant 0 : index
    %c0_45 = arith.constant 0 : index
    %97 = vector.load %arg10[%c0_44, %c0_45] : memref<1x128xf32, #tpu.memory_space<vmem>>, vector<1x128xf32>
    %cst_46 = arith.constant dense<0.000000e+00> : vector<8xf32>
    %98 = vector.multi_reduction <add>, %95, %cst_46 [1] : vector<8x128xf32> to vector<8xf32>
    %99 = vector.shape_cast %98 : vector<8xf32> to vector<8x1xf32>
    %cst_47 = arith.constant 1.280000e+02 : f32
    %100 = vector.broadcast %cst_47 : f32 to vector<8x1xf32>
    %101 = arith.divf %99, %100 : vector<8x1xf32>
    %102 = vector.broadcast %101 : vector<8x1xf32> to vector<8x128xf32>
    %103 = arith.subf %95, %102 : vector<8x128xf32>
    %104 = arith.mulf %103, %103 : vector<8x128xf32>
    %cst_48 = arith.constant dense<0.000000e+00> : vector<8xf32>
    %105 = vector.multi_reduction <add>, %104, %cst_48 [1] : vector<8x128xf32> to vector<8xf32>
    %106 = vector.shape_cast %105 : vector<8xf32> to vector<8x1xf32>
    %cst_49 = arith.constant 1.280000e+02 : f32
    %107 = vector.broadcast %cst_49 : f32 to vector<8x1xf32>
    %108 = arith.divf %106, %107 : vector<8x1xf32>
    %cst_50 = arith.constant 9.99999974E-6 : f32
    %109 = vector.broadcast %cst_50 : f32 to vector<8x1xf32>
    %110 = arith.addf %108, %109 : vector<8x1xf32>
    %111 = math.rsqrt %110 : vector<8x1xf32>
    %112 = vector.broadcast %111 : vector<8x1xf32> to vector<8x128xf32>
    %113 = arith.mulf %103, %112 : vector<8x128xf32>
    %114 = vector.broadcast %96 : vector<1x128xf32> to vector<8x128xf32>
    %115 = arith.mulf %113, %114 : vector<8x128xf32>
    %116 = vector.broadcast %97 : vector<1x128xf32> to vector<8x128xf32>
    %117 = arith.addf %115, %116 : vector<8x128xf32>
    %118 = arith.addf %1, %117 : vector<8x128xf32>
    %c0_51 = arith.constant 0 : index
    %c0_52 = arith.constant 0 : index
    %119 = vector.load %arg11[%c0_51, %c0_52] : memref<1x128xf32, #tpu.memory_space<vmem>>, vector<1x128xf32>
    %c0_53 = arith.constant 0 : index
    %c0_54 = arith.constant 0 : index
    %120 = vector.load %arg12[%c0_53, %c0_54] : memref<1x128xf32, #tpu.memory_space<vmem>>, vector<1x128xf32>
    %cst_55 = arith.constant dense<0.000000e+00> : vector<8xf32>
    %121 = vector.multi_reduction <add>, %118, %cst_55 [1] : vector<8x128xf32> to vector<8xf32>
    %122 = vector.shape_cast %121 : vector<8xf32> to vector<8x1xf32>
    %cst_56 = arith.constant 1.280000e+02 : f32
    %123 = vector.broadcast %cst_56 : f32 to vector<8x1xf32>
    %124 = arith.divf %122, %123 : vector<8x1xf32>
    %125 = vector.broadcast %124 : vector<8x1xf32> to vector<8x128xf32>
    %126 = arith.subf %118, %125 : vector<8x128xf32>
    %127 = arith.mulf %126, %126 : vector<8x128xf32>
    %cst_57 = arith.constant dense<0.000000e+00> : vector<8xf32>
    %128 = vector.multi_reduction <add>, %127, %cst_57 [1] : vector<8x128xf32> to vector<8xf32>
    %129 = vector.shape_cast %128 : vector<8xf32> to vector<8x1xf32>
    %cst_58 = arith.constant 1.280000e+02 : f32
    %130 = vector.broadcast %cst_58 : f32 to vector<8x1xf32>
    %131 = arith.divf %129, %130 : vector<8x1xf32>
    %cst_59 = arith.constant 9.99999974E-6 : f32
    %132 = vector.broadcast %cst_59 : f32 to vector<8x1xf32>
    %133 = arith.addf %131, %132 : vector<8x1xf32>
    %134 = math.rsqrt %133 : vector<8x1xf32>
    %135 = vector.broadcast %134 : vector<8x1xf32> to vector<8x128xf32>
    %136 = arith.mulf %126, %135 : vector<8x128xf32>
    %137 = vector.broadcast %119 : vector<1x128xf32> to vector<8x128xf32>
    %138 = arith.mulf %136, %137 : vector<8x128xf32>
    %139 = vector.broadcast %120 : vector<1x128xf32> to vector<8x128xf32>
    %140 = arith.addf %138, %139 : vector<8x128xf32>
    %c0_60 = arith.constant 0 : index
    %c0_61 = arith.constant 0 : index
    %c0_62 = arith.constant 0 : index
    %141 = vector.load %arg13[%c0_60, %c0_61, %c0_62] : memref<1x8x128xf32, #tpu.memory_space<vmem>>, vector<1x8x128xf32>
    %142 = vector.shape_cast %141 : vector<1x8x128xf32> to vector<8x128xf32>
    %143 = vector.shape_cast %140 : vector<8x128xf32> to vector<1x8x128xf32>
    tpu.vector_store %arg13[%c0_60, %c0_61, %c0_62], %143 {strides = array<i32>} : memref<1x8x128xf32, #tpu.memory_space<vmem>>, vector<1x8x128xf32>,
    return
  }
  func.func @transform_0(%arg0: i32) -> (i32, i32, i32) {
    %c0_i32 = arith.constant 0 : i32
    %c0_i32_0 = arith.constant 0 : i32
    %c0_i32_1 = arith.constant 0 : i32
    return %arg0, %c0_i32, %c0_i32_0 : i32, i32, i32
  }
  func.func @transform_1(%arg0: i32) -> (i32, i32, i32) {
    %c0_i32 = arith.constant 0 : i32
    %c0_i32_0 = arith.constant 0 : i32
    %c0_i32_1 = arith.constant 0 : i32
    return %arg0, %c0_i32, %c0_i32_0 : i32, i32, i32
  }
  func.func @transform_2(%arg0: i32) -> (i32, i32) {
    %c0_i32 = arith.constant 0 : i32
    %c0_i32_0 = arith.constant 0 : i32
    %c0_i32_1 = arith.constant 0 : i32
    return %c0_i32, %c0_i32_0 : i32, i32
  }
  func.func @transform_3(%arg0: i32) -> (i32, i32) {
    %c0_i32 = arith.constant 0 : i32
    %c0_i32_0 = arith.constant 0 : i32
    %c0_i32_1 = arith.constant 0 : i32
    return %c0_i32, %c0_i32_0 : i32, i32
  }
  func.func @transform_4(%arg0: i32) -> (i32, i32) {
    %c0_i32 = arith.constant 0 : i32
    %c0_i32_0 = arith.constant 0 : i32
    %c0_i32_1 = arith.constant 0 : i32
    return %c0_i32, %c0_i32_0 : i32, i32
  }
  func.func @transform_5(%arg0: i32) -> (i32, i32) {
    %c0_i32 = arith.constant 0 : i32
    %c0_i32_0 = arith.constant 0 : i32
    %c0_i32_1 = arith.constant 0 : i32
    return %c0_i32, %c0_i32_0 : i32, i32
  }
  func.func @transform_6(%arg0: i32) -> (i32, i32) {
    %c0_i32 = arith.constant 0 : i32
    %c0_i32_0 = arith.constant 0 : i32
    %c0_i32_1 = arith.constant 0 : i32
    return %c0_i32, %c0_i32_0 : i32, i32
  }
  func.func @transform_7(%arg0: i32) -> (i32, i32) {
    %c0_i32 = arith.constant 0 : i32
    %c0_i32_0 = arith.constant 0 : i32
    %c0_i32_1 = arith.constant 0 : i32
    return %c0_i32, %c0_i32_0 : i32, i32
  }
  func.func @transform_8(%arg0: i32) -> (i32, i32) {
    %c0_i32 = arith.constant 0 : i32
    %c0_i32_0 = arith.constant 0 : i32
    %c0_i32_1 = arith.constant 0 : i32
    return %c0_i32, %c0_i32_0 : i32, i32
  }
  func.func @transform_9(%arg0: i32) -> (i32, i32) {
    %c0_i32 = arith.constant 0 : i32
    %c0_i32_0 = arith.constant 0 : i32
    %c0_i32_1 = arith.constant 0 : i32
    return %c0_i32, %c0_i32_0 : i32, i32
  }
  func.func @transform_10(%arg0: i32) -> (i32, i32) {
    %c0_i32 = arith.constant 0 : i32
    %c0_i32_0 = arith.constant 0 : i32
    %c0_i32_1 = arith.constant 0 : i32
    return %c0_i32, %c0_i32_0 : i32, i32
  }
  func.func @transform_11(%arg0: i32) -> (i32, i32) {
    %c0_i32 = arith.constant 0 : i32
    %c0_i32_0 = arith.constant 0 : i32
    %c0_i32_1 = arith.constant 0 : i32
    return %c0_i32, %c0_i32_0 : i32, i32
  }
  func.func @transform_12(%arg0: i32) -> (i32, i32, i32) {
    %c0_i32 = arith.constant 0 : i32
    %c0_i32_0 = arith.constant 0 : i32
    %c0_i32_1 = arith.constant 0 : i32
    return %arg0, %c0_i32, %c0_i32_0 : i32, i32, i32
  }
}

</mosaic_0001>

<llo_original>
// kernel: tpu_custom_call.1
$region0: #{tpu_custom_call.1}
  #allocation0 [shape = 'u32[]', space=smem, size = 0x4, offset = 0x4, fixed_abs, tag = 'smem constant byte address 0x4 - core index']
  #allocation1 [shape = 'u32[144,128]{1,0:T(1,128)}', space=vmem, size = 0x12000, scoped, tag = 'internal scratch']
  %s0 = inlined_call_operand.hbm [shape: f32[2,8,128], index: 0, kind: input, shape index: {}]
  %s1 = inlined_call_operand.hbm [shape: f32[2,8,128], index: 1, kind: input, shape index: {}]
  %s2 = inlined_call_operand.hbm [shape: f32[128,128], index: 2, kind: input, shape index: {}]
  %s3 = inlined_call_operand.vmem [shape: f32[1,128], index: 3, kind: input, shape index: {}]
  %s4 = inlined_call_operand.hbm [shape: f32[128,256], index: 4, kind: input, shape index: {}]
  %s5 = inlined_call_operand.vmem [shape: f32[1,256], index: 5, kind: input, shape index: {}]
  %s6 = inlined_call_operand.hbm [shape: f32[128,128], index: 6, kind: input, shape index: {}]
  %s7 = inlined_call_operand.vmem [shape: f32[1,128], index: 7, kind: input, shape index: {}]
  %s8 = inlined_call_operand.vmem [shape: f32[1,128], index: 8, kind: input, shape index: {}]
  %s9 = inlined_call_operand.vmem [shape: f32[1,128], index: 9, kind: input, shape index: {}]
  %s10 = inlined_call_operand.vmem [shape: f32[1,128], index: 10, kind: input, shape index: {}]
  %s11 = inlined_call_operand.vmem [shape: f32[1,128], index: 11, kind: input, shape index: {}]
  %s12 = inlined_call_operand.hbm [shape: f32[2,8,128], index: 12, kind: output, shape index: {}]
  %s13 = sld [smem:[#allocation0]]
  $region101: #{tpu_custom_call.1} parent=0
    _
  %s15 = ssub.s32 1, %s13
  %s16 = scalar_select 0, %s15, %s13
  $region1: #{tpu_custom_call.1} parent=0
    #allocation2 [shape = 'u8[8192]{0}', space=vmem, size = 0x2000, scoped, tag = 'input window, operand 0']
    #allocation3 [shape = 's32[2]{0}', space=sflag, size = 0x8, scoped, tag = 'scoped memory for tpu_custom_call.1']
    #allocation4 [shape = 's32[2]{0}', space=sflag, size = 0x8, scoped, tag = 'scoped memory for tpu_custom_call.1']
    #allocation5 [shape = 'u8[8192]{0}', space=vmem, size = 0x2000, scoped, tag = 'input window, operand 1']
    #allocation6 [shape = 's32[2]{0}', space=sflag, size = 0x8, scoped, tag = 'scoped memory for tpu_custom_call.1']
    #allocation7 [shape = 'u8[65536]{0}', space=vmem, size = 0x10000, scoped, tag = 'input window, operand 2, single buffered']
    #allocation8 [shape = 'u8[131072]{0}', space=vmem, size = 0x20000, scoped, tag = 'input window, operand 4, single buffered']
    #allocation9 [shape = 's32[1]{0}', space=sflag, size = 0x4, scoped, tag = 'scoped memory for tpu_custom_call.1']
    #allocation10 [shape = 'u8[65536]{0}', space=vmem, size = 0x10000, scoped, tag = 'input window, operand 6, single buffered']
    #allocation11 [shape = 'u8[8192]{0}', space=vmem, size = 0x2000, scoped, tag = 'output window, operand 0']
    %17 = vsyncpa [#allocation3], 0
    %s18 = scalar_lea.sflag [#allocation3], 1
    %19 = vsyncpa %s18, 0
    %20 = vsyncpa [#allocation6], 0
    %s21 = scalar_lea.sflag [#allocation6], 1
    %22 = vsyncpa %s21, 0
    %23 = vsyncpa [#allocation9], 0
    %24 = vsyncpa [#allocation4], 0
    %s25 = scalar_lea.sflag [#allocation4], 1
    %26 = vsyncpa %s25, 0
    loop: start=0, step=1, limit=4
    $region2: #{tpu_custom_call.1} parent=1 // loop_pre_header
      _
    $region3: #{tpu_custom_call.1} parent=1 // loop_header
      %s28 = sphi 0, %s32
      %p29 = scmp.ge.s32.totalorder %s28, 4
      %s38 = sphi 0, %s40
      %s41 = sphi 0, %s38
      %s42 = sphi 0, %s41
      %s58 = sphi 0, %s42
      %s64 = sphi 0, %s66
      %s67 = sphi 0, %s64
      %s68 = sphi 0, %s67
      %s84 = sphi 0, %s68
      %s88 = sphi 0, %s88
      %s90 = sphi 0, %s88
      %s91 = sphi 0, %s90
      %s105 = sphi 0, %s91
      %s109 = sphi 0, %s109
      %s111 = sphi 0, %s109
      %s112 = sphi 0, %s111
      %s126 = sphi 0, %s112
      %s130 = sphi 0, %s130
      %s132 = sphi 0, %s130
      %s133 = sphi 0, %s132
      %s147 = sphi 0, %s133
      %s151 = sphi 0, %s151
      %s153 = sphi 0, %s151
      %s154 = sphi 0, %s153
      %s168 = sphi 0, %s154
      %s172 = sphi 0, %s172
      %s174 = sphi 0, %s172
      %s175 = sphi 0, %s174
      %s189 = sphi 0, %s175
      %s193 = sphi 0, %s193
      %s195 = sphi 0, %s193
      %s196 = sphi 0, %s195
      %s210 = sphi 0, %s196
      %s214 = sphi 0, %s214
      %s216 = sphi 0, %s214
      %s217 = sphi 0, %s216
      %s231 = sphi 0, %s217
      %s235 = sphi 0, %s235
      %s237 = sphi 0, %s235
      %s238 = sphi 0, %s237
      %s252 = sphi 0, %s238
      %s256 = sphi 0, %s256
      %s258 = sphi 0, %s256
      %s259 = sphi 0, %s258
      %s273 = sphi 0, %s259
      %s277 = sphi 0, %s277
      %s279 = sphi 0, %s277
      %s280 = sphi 0, %s279
      %s294 = sphi 0, %s280
      %s300 = sphi 0, %s302
      %s303 = sphi 0, %s300
      %s304 = sphi 0, %s303
      %s320 = sphi 0, %s304
    $region4: #{tpu_custom_call.1} parent=1 // loop_header_branch
      %31 = sbr.rel (%p29) target = $region8
    $region5: #{tpu_custom_call.1} parent=1 // loop_body
      %s33 = ssub.s32 %s28, 1
      %s34 = ssub.s32 %s28, 2
      %s35 = sadd.s32 %s28, 1
      %s36 = ssub.s32 %s28, %s35
      %p37 = scmp.eq.s32.totalorder %s36, 0
      %s39 = sadd.s32 %s38, 1
      %s40 = scalar_select %p37, %s38, %s39
      %p43 = pneg %p37
      %p44 = scmp.eq.s32.totalorder %s28, 1
      %p45 = por %p43, %p44
      %p46 = scmp.ne.s32.totalorder %s38, %s41
      %p47 = scmp.eq.s32.totalorder %s28, 0
      %p48 = por %p46, %p47
      %p49 = scmp.ne.s32.totalorder %s38, %s41
      %p50 = scmp.eq.s32.totalorder %s33, 1
      %p51 = por %p49, %p50
      %p52 = scmp.ne.s32.totalorder %s41, %s42
      %p53 = scmp.eq.s32.totalorder %s33, 0
      %p54 = por %p52, %p53
      %p55 = scmp.ne.s32.totalorder %s41, %s42
      %p56 = scmp.eq.s32.totalorder %s34, 1
      %p57 = por %p55, %p56
      %p59 = scmp.ne.s32.totalorder %s42, %s58
      %p60 = scmp.eq.s32.totalorder %s34, 0
      %p61 = por %p59, %p60
      %s62 = ssub.s32 %s28, %s35
      %p63 = scmp.eq.s32.totalorder %s62, 0
      %s65 = sadd.s32 %s64, 1
      %s66 = scalar_select %p63, %s64, %s65
      %p69 = pneg %p63
      %p70 = scmp.eq.s32.totalorder %s28, 1
      %p71 = por %p69, %p70
      %p72 = scmp.ne.s32.totalorder %s64, %s67
      %p73 = scmp.eq.s32.totalorder %s28, 0
      %p74 = por %p72, %p73
      %p75 = scmp.ne.s32.totalorder %s64, %s67
      %p76 = scmp.eq.s32.totalorder %s33, 1
      %p77 = por %p75, %p76
      %p78 = scmp.ne.s32.totalorder %s67, %s68
      %p79 = scmp.eq.s32.totalorder %s33, 0
      %p80 = por %p78, %p79
      %p81 = scmp.ne.s32.totalorder %s67, %s68
      %p82 = scmp.eq.s32.totalorder %s34, 1
      %p83 = por %p81, %p82
      %p85 = scmp.ne.s32.totalorder %s68, %s84
      %p86 = scmp.eq.s32.totalorder %s34, 0
      %p87 = por %p85, %p86
      %s89 = sadd.s32 %s88, 1
      %p92 = scmp.eq.s32.totalorder %s28, 1
      %p93 = scmp.ne.s32.totalorder %s88, %s90
      %p94 = scmp.eq.s32.totalorder %s28, 0
      %p95 = por %p93, %p94
      %p96 = scmp.ne.s32.totalorder %s88, %s90
      %p97 = scmp.eq.s32.totalorder %s33, 1
      %p98 = por %p96, %p97
      %p99 = scmp.ne.s32.totalorder %s90, %s91
      %p100 = scmp.eq.s32.totalorder %s33, 0
      %p101 = por %p99, %p100
      %p102 = scmp.ne.s32.totalorder %s90, %s91
      %p103 = scmp.eq.s32.totalorder %s34, 1
      %p104 = por %p102, %p103
      %p106 = scmp.ne.s32.totalorder %s91, %s105
      %p107 = scmp.eq.s32.totalorder %s34, 0
      %p108 = por %p106, %p107
      %s110 = sadd.s32 %s109, 1
      %p113 = scmp.eq.s32.totalorder %s28, 1
      %p114 = scmp.ne.s32.totalorder %s109, %s111
      %p115 = scmp.eq.s32.totalorder %s28, 0
      %p116 = por %p114, %p115
      %p117 = scmp.ne.s32.totalorder %s109, %s111
      %p118 = scmp.eq.s32.totalorder %s33, 1
      %p119 = por %p117, %p118
      %p120 = scmp.ne.s32.totalorder %s111, %s112
      %p121 = scmp.eq.s32.totalorder %s33, 0
      %p122 = por %p120, %p121
      %p123 = scmp.ne.s32.totalorder %s111, %s112
      %p124 = scmp.eq.s32.totalorder %s34, 1
      %p125 = por %p123, %p124
      %p127 = scmp.ne.s32.totalorder %s112, %s126
      %p128 = scmp.eq.s32.totalorder %s34, 0
      %p129 = por %p127, %p128
      %s131 = sadd.s32 %s130, 1
      %p134 = scmp.eq.s32.totalorder %s28, 1
      %p135 = scmp.ne.s32.totalorder %s130, %s132
      %p136 = scmp.eq.s32.totalorder %s28, 0
      %p137 = por %p135, %p136
      %p138 = scmp.ne.s32.totalorder %s130, %s132
      %p139 = scmp.eq.s32.totalorder %s33, 1
      %p140 = por %p138, %p139
      %p141 = scmp.ne.s32.totalorder %s132, %s133
      %p142 = scmp.eq.s32.totalorder %s33, 0
      %p143 = por %p141, %p142
      %p144 = scmp.ne.s32.totalorder %s132, %s133
      %p145 = scmp.eq.s32.totalorder %s34, 1
      %p146 = por %p144, %p145
      %p148 = scmp.ne.s32.totalorder %s133, %s147
      %p149 = scmp.eq.s32.totalorder %s34, 0
      %p150 = por %p148, %p149
      %s152 = sadd.s32 %s151, 1
      %p155 = scmp.eq.s32.totalorder %s28, 1
      %p156 = scmp.ne.s32.totalorder %s151, %s153
      %p157 = scmp.eq.s32.totalorder %s28, 0
      %p158 = por %p156, %p157
      %p159 = scmp.ne.s32.totalorder %s151, %s153
      %p160 = scmp.eq.s32.totalorder %s33, 1
      %p161 = por %p159, %p160
      %p162 = scmp.ne.s32.totalorder %s153, %s154
      %p163 = scmp.eq.s32.totalorder %s33, 0
      %p164 = por %p162, %p163
      %p165 = scmp.ne.s32.totalorder %s153, %s154
      %p166 = scmp.eq.s32.totalorder %s34, 1
      %p167 = por %p165, %p166
      %p169 = scmp.ne.s32.totalorder %s154, %s168
      %p170 = scmp.eq.s32.totalorder %s34, 0
      %p171 = por %p169, %p170
      %s173 = sadd.s32 %s172, 1
      %p176 = scmp.eq.s32.totalorder %s28, 1
      %p177 = scmp.ne.s32.totalorder %s172, %s174
      %p178 = scmp.eq.s32.totalorder %s28, 0
      %p179 = por %p177, %p178
      %p180 = scmp.ne.s32.totalorder %s172, %s174
      %p181 = scmp.eq.s32.totalorder %s33, 1
      %p182 = por %p180, %p181
      %p183 = scmp.ne.s32.totalorder %s174, %s175
      %p184 = scmp.eq.s32.totalorder %s33, 0
      %p185 = por %p183, %p184
      %p186 = scmp.ne.s32.totalorder %s174, %s175
      %p187 = scmp.eq.s32.totalorder %s34, 1
      %p188 = por %p186, %p187
      %p190 = scmp.ne.s32.totalorder %s175, %s189
      %p191 = scmp.eq.s32.totalorder %s34, 0
      %p192 = por %p190, %p191
      %s194 = sadd.s32 %s193, 1
      %p197 = scmp.eq.s32.totalorder %s28, 1
      %p198 = scmp.ne.s32.totalorder %s193, %s195
      %p199 = scmp.eq.s32.totalorder %s28, 0
      %p200 = por %p198, %p199
      %p201 = scmp.ne.s32.totalorder %s193, %s195
      %p202 = scmp.eq.s32.totalorder %s33, 1
      %p203 = por %p201, %p202
      %p204 = scmp.ne.s32.totalorder %s195, %s196
      %p205 = scmp.eq.s32.totalorder %s33, 0
      %p206 = por %p204, %p205
      %p207 = scmp.ne.s32.totalorder %s195, %s196
      %p208 = scmp.eq.s32.totalorder %s34, 1
      %p209 = por %p207, %p208
      %p211 = scmp.ne.s32.totalorder %s196, %s210
      %p212 = scmp.eq.s32.totalorder %s34, 0
      %p213 = por %p211, %p212
      %s215 = sadd.s32 %s214, 1
      %p218 = scmp.eq.s32.totalorder %s28, 1
      %p219 = scmp.ne.s32.totalorder %s214, %s216
      %p220 = scmp.eq.s32.totalorder %s28, 0
      %p221 = por %p219, %p220
      %p222 = scmp.ne.s32.totalorder %s214, %s216
      %p223 = scmp.eq.s32.totalorder %s33, 1
      %p224 = por %p222, %p223
      %p225 = scmp.ne.s32.totalorder %s216, %s217
      %p226 = scmp.eq.s32.totalorder %s33, 0
      %p227 = por %p225, %p226
      %p228 = scmp.ne.s32.totalorder %s216, %s217
      %p229 = scmp.eq.s32.totalorder %s34, 1
      %p230 = por %p228, %p229
      %p232 = scmp.ne.s32.totalorder %s217, %s231
      %p233 = scmp.eq.s32.totalorder %s34, 0
      %p234 = por %p232, %p233
      %s236 = sadd.s32 %s235, 1
      %p239 = scmp.eq.s32.totalorder %s28, 1
      %p240 = scmp.ne.s32.totalorder %s235, %s237
      %p241 = scmp.eq.s32.totalorder %s28, 0
      %p242 = por %p240, %p241
      %p243 = scmp.ne.s32.totalorder %s235, %s237
      %p244 = scmp.eq.s32.totalorder %s33, 1
      %p245 = por %p243, %p244
      %p246 = scmp.ne.s32.totalorder %s237, %s238
      %p247 = scmp.eq.s32.totalorder %s33, 0
      %p248 = por %p246, %p247
      %p249 = scmp.ne.s32.totalorder %s237, %s238
      %p250 = scmp.eq.s32.totalorder %s34, 1
      %p251 = por %p249, %p250
      %p253 = scmp.ne.s32.totalorder %s238, %s252
      %p254 = scmp.eq.s32.totalorder %s34, 0
      %p255 = por %p253, %p254
      %s257 = sadd.s32 %s256, 1
      %p260 = scmp.eq.s32.totalorder %s28, 1
      %p261 = scmp.ne.s32.totalorder %s256, %s258
      %p262 = scmp.eq.s32.totalorder %s28, 0
      %p263 = por %p261, %p262
      %p264 = scmp.ne.s32.totalorder %s256, %s258
      %p265 = scmp.eq.s32.totalorder %s33, 1
      %p266 = por %p264, %p265
      %p267 = scmp.ne.s32.totalorder %s258, %s259
      %p268 = scmp.eq.s32.totalorder %s33, 0
      %p269 = por %p267, %p268
      %p270 = scmp.ne.s32.totalorder %s258, %s259
      %p271 = scmp.eq.s32.totalorder %s34, 1
      %p272 = por %p270, %p271
      %p274 = scmp.ne.s32.totalorder %s259, %s273
      %p275 = scmp.eq.s32.totalorder %s34, 0
      %p276 = por %p274, %p275
      %s278 = sadd.s32 %s277, 1
      %p281 = scmp.eq.s32.totalorder %s28, 1
      %p282 = scmp.ne.s32.totalorder %s277, %s279
      %p283 = scmp.eq.s32.totalorder %s28, 0
      %p284 = por %p282, %p283
      %p285 = scmp.ne.s32.totalorder %s277, %s279
      %p286 = scmp.eq.s32.totalorder %s33, 1
      %p287 = por %p285, %p286
      %p288 = scmp.ne.s32.totalorder %s279, %s280
      %p289 = scmp.eq.s32.totalorder %s33, 0
      %p290 = por %p288, %p289
      %p291 = scmp.ne.s32.totalorder %s279, %s280
      %p292 = scmp.eq.s32.totalorder %s34, 1
      %p293 = por %p291, %p292
      %p295 = scmp.ne.s32.totalorder %s280, %s294
      %p296 = scmp.eq.s32.totalorder %s34, 0
      %p297 = por %p295, %p296
      %s298 = ssub.s32 %s28, %s35
      %p299 = scmp.eq.s32.totalorder %s298, 0
      %s301 = sadd.s32 %s300, 1
      %s302 = scalar_select %p299, %s300, %s301
      %p305 = pneg %p299
      %p306 = scmp.eq.s32.totalorder %s28, 1
      %p307 = por %p305, %p306
      %p308 = scmp.ne.s32.totalorder %s300, %s303
      %p309 = scmp.eq.s32.totalorder %s28, 0
      %p310 = por %p308, %p309
      %p311 = scmp.ne.s32.totalorder %s300, %s303
      %p312 = scmp.eq.s32.totalorder %s33, 1
      %p313 = por %p311, %p312
      %p314 = scmp.ne.s32.totalorder %s303, %s304
      %p315 = scmp.eq.s32.totalorder %s33, 0
      %p316 = por %p314, %p315
      %p317 = scmp.ne.s32.totalorder %s303, %s304
      %p318 = scmp.eq.s32.totalorder %s34, 1
      %p319 = por %p317, %p318
      %p321 = scmp.ne.s32.totalorder %s304, %s320
      %p322 = scmp.eq.s32.totalorder %s34, 0
      %p323 = por %p321, %p322
      %p324 = scmp.le.s32.totalorder 1, %s28
      %p325 = scmp.lt.s32.totalorder %s28, 3
      %p326 = pnand %p324, %p325
      %p327 = pneg %p326
      // Predicated region
      $region9: #{tpu_custom_call.1} parent=5 // pred_check
        _
      $region10: #{tpu_custom_call.1} parent=5 // pred_check_branch
        %329 = sbr.rel (%p326) target = $region12
      $region11: #{tpu_custom_call.1} parent=5 // pred_region
        %s330 = ssub.s32 %s28, 1
        // Predicated region
        $region13: #{tpu_custom_call.1} parent=11 // pred_check
          %p331 = pneg %p101
        $region14: #{tpu_custom_call.1} parent=11 // pred_check_branch
          %333 = sbr.rel (%p331) target = $region16
        $region15: #{tpu_custom_call.1} parent=11 // pred_region
          %s335 = ssub.s32 2048, 2048
          %336 = vsyncadd [#allocation6], %s335
          %s337 = sshll.u32 [#allocation7], 4
          %s338 = int_to_ptr.vmem [resolvable:$true] %s337
          %343 = dma.hbm_to_vmem [thread:$0]  %s2, 2048, %s338, [#allocation6], 128, 128, 8
        $region16: #{tpu_custom_call.1} parent=11 // pred_fallthru
          _
        // Predicated region
        $region17: #{tpu_custom_call.1} parent=11 // pred_check
          %p344 = pneg %p122
        $region18: #{tpu_custom_call.1} parent=11 // pred_check_branch
          %346 = sbr.rel (%p344) target = $region20
        $region19: #{tpu_custom_call.1} parent=11 // pred_region
          _
        $region20: #{tpu_custom_call.1} parent=11 // pred_fallthru
          _
        // Predicated region
        $region21: #{tpu_custom_call.1} parent=11 // pred_check
          %p347 = pneg %p143
        $region22: #{tpu_custom_call.1} parent=11 // pred_check_branch
          %349 = sbr.rel (%p347) target = $region24
        $region23: #{tpu_custom_call.1} parent=11 // pred_region
          %s351 = ssub.s32 4096, 4096
          %352 = vsyncadd [#allocation9], %s351
          %s353 = sshll.u32 [#allocation8], 4
          %s354 = int_to_ptr.vmem [resolvable:$true] %s353
          %359 = dma.hbm_to_vmem [thread:$0]  %s4, 4096, %s354, [#allocation9], 256, 256, 16
        $region24: #{tpu_custom_call.1} parent=11 // pred_fallthru
          _
        // Predicated region
        $region25: #{tpu_custom_call.1} parent=11 // pred_check
          %p360 = pneg %p164
        $region26: #{tpu_custom_call.1} parent=11 // pred_check_branch
          %362 = sbr.rel (%p360) target = $region28
        $region27: #{tpu_custom_call.1} parent=11 // pred_region
          _
        $region28: #{tpu_custom_call.1} parent=11 // pred_fallthru
          _
        // Predicated region
        $region29: #{tpu_custom_call.1} parent=11 // pred_check
          %p363 = pneg %p185
        $region30: #{tpu_custom_call.1} parent=11 // pred_check_branch
          %365 = sbr.rel (%p363) target = $region32
        $region31: #{tpu_custom_call.1} parent=11 // pred_region
          %s367 = ssub.s32 2048, 2048
          %368 = vsyncadd [#allocation9], %s367
          %s369 = sshll.u32 [#allocation10], 4
          %s370 = int_to_ptr.vmem [resolvable:$true] %s369
          %375 = dma.hbm_to_vmem [thread:$0]  %s6, 2048, %s370, [#allocation9], 128, 128, 8
        $region32: #{tpu_custom_call.1} parent=11 // pred_fallthru
          _
        // Predicated region
        $region33: #{tpu_custom_call.1} parent=11 // pred_check
          %p376 = pneg %p206
        $region34: #{tpu_custom_call.1} parent=11 // pred_check_branch
          %378 = sbr.rel (%p376) target = $region36
        $region35: #{tpu_custom_call.1} parent=11 // pred_region
          _
        $region36: #{tpu_custom_call.1} parent=11 // pred_fallthru
          _
        // Predicated region
        $region37: #{tpu_custom_call.1} parent=11 // pred_check
          %p379 = pneg %p227
        $region38: #{tpu_custom_call.1} parent=11 // pred_check_branch
          %381 = sbr.rel (%p379) target = $region40
        $region39: #{tpu_custom_call.1} parent=11 // pred_region
          _
        $region40: #{tpu_custom_call.1} parent=11 // pred_fallthru
          _
        // Predicated region
        $region41: #{tpu_custom_call.1} parent=11 // pred_check
          %p382 = pneg %p248
        $region42: #{tpu_custom_call.1} parent=11 // pred_check_branch
          %384 = sbr.rel (%p382) target = $region44
        $region43: #{tpu_custom_call.1} parent=11 // pred_region
          _
        $region44: #{tpu_custom_call.1} parent=11 // pred_fallthru
          _
        // Predicated region
        $region45: #{tpu_custom_call.1} parent=11 // pred_check
          %p385 = pneg %p269
        $region46: #{tpu_custom_call.1} parent=11 // pred_check_branch
          %387 = sbr.rel (%p385) target = $region48
        $region47: #{tpu_custom_call.1} parent=11 // pred_region
          _
        $region48: #{tpu_custom_call.1} parent=11 // pred_fallthru
          _
        // Predicated region
        $region49: #{tpu_custom_call.1} parent=11 // pred_check
          %p388 = pneg %p290
        $region50: #{tpu_custom_call.1} parent=11 // pred_check_branch
          %390 = sbr.rel (%p388) target = $region52
        $region51: #{tpu_custom_call.1} parent=11 // pred_region
          _
        $region52: #{tpu_custom_call.1} parent=11 // pred_fallthru
          _
      $region12: #{tpu_custom_call.1} parent=5 // pred_fallthru
        _
      %p391 = scmp.lt.s32.totalorder %s28, 2
      // Predicated region
      $region53: #{tpu_custom_call.1} parent=5 // pred_check
        %p392 = pneg %p391
      $region54: #{tpu_custom_call.1} parent=5 // pred_check_branch
        %394 = sbr.rel (%p392) target = $region56
      $region55: #{tpu_custom_call.1} parent=5 // pred_region
        // Predicated region
        $region57: #{tpu_custom_call.1} parent=55 // pred_check
          %p395 = pneg %p48
        $region58: #{tpu_custom_call.1} parent=55 // pred_check_branch
          %397 = sbr.rel (%p395) target = $region60
        $region59: #{tpu_custom_call.1} parent=55 // pred_region
          %s398 = sand.u32 %s38, 1
          %s399 = scalar_lea.sflag [#allocation3], %s398
          %s400 = sand.u32 %s38, 1
          %s401 = smul.addr %s400, 8
          %s402 = scalar_lea.vmem [#allocation2], %s401
          %s404 = ssub.s32 128, 128
          %405 = vsyncadd %s399, %s404
          %s406 = smul.addr %s28, 128
          %s407 = scalar_lea.hbm %s0, %s406
          %s409 = sshll.u32 %s402, 4
          %s410 = int_to_ptr.vmem [resolvable:$true] %s409
          %412 = dma.hbm_to_vmem [thread:$0]  %s407, 128, %s410, %s399
        $region60: #{tpu_custom_call.1} parent=55 // pred_fallthru
          _
        // Predicated region
        $region61: #{tpu_custom_call.1} parent=55 // pred_check
          %p413 = pneg %p74
        $region62: #{tpu_custom_call.1} parent=55 // pred_check_branch
          %415 = sbr.rel (%p413) target = $region64
        $region63: #{tpu_custom_call.1} parent=55 // pred_region
          %s416 = sand.u32 %s28, 1
          %s417 = scalar_lea.sflag [#allocation6], %s416
          %s418 = sand.u32 %s64, 1
          %s419 = smul.addr %s418, 8
          %s420 = scalar_lea.vmem [#allocation5], %s419
          %s422 = ssub.s32 128, 128
          %423 = vsyncadd %s417, %s422
          %s424 = smul.addr %s28, 128
          %s425 = scalar_lea.hbm %s1, %s424
          %s427 = sshll.u32 %s420, 4
          %s428 = int_to_ptr.vmem [resolvable:$true] %s427
          %430 = dma.hbm_to_vmem [thread:$0]  %s425, 128, %s428, %s417
        $region64: #{tpu_custom_call.1} parent=55 // pred_fallthru
          _
      $region56: #{tpu_custom_call.1} parent=5 // pred_fallthru
        _
      %p431 = scmp.le.s32.totalorder 1, %s28
      %p432 = scmp.lt.s32.totalorder %s28, 3
      %p433 = pnand %p431, %p432
      %p434 = pneg %p433
      // Predicated region
      $region65: #{tpu_custom_call.1} parent=5 // pred_check
        _
      $region66: #{tpu_custom_call.1} parent=5 // pred_check_branch
        %436 = sbr.rel (%p433) target = $region68
      $region67: #{tpu_custom_call.1} parent=5 // pred_region
        %s437 = ssub.s32 %s28, 1
        %s438 = sand.u32 %s41, 1
        %s439 = scalar_lea.sflag [#allocation3], %s438
        %s440 = sand.u32 %s41, 1
        %s441 = smul.addr %s440, 8
        %s442 = scalar_lea.vmem [#allocation2], %s441
        // Predicated region
        $region69: #{tpu_custom_call.1} parent=67 // pred_check
          %p443 = pneg %p54
        $region70: #{tpu_custom_call.1} parent=67 // pred_check_branch
          %445 = sbr.rel (%p443) target = $region72
        $region71: #{tpu_custom_call.1} parent=67 // pred_region
          %446 = dma.done %s439, 128
        $region72: #{tpu_custom_call.1} parent=67 // pred_fallthru
          _
        %s447 = sand.u32 %s33, 1
        %s448 = scalar_lea.sflag [#allocation6], %s447
        %s449 = sand.u32 %s67, 1
        %s450 = smul.addr %s449, 8
        %s451 = scalar_lea.vmem [#allocation5], %s450
        // Predicated region
        $region73: #{tpu_custom_call.1} parent=67 // pred_check
          %p452 = pneg %p80
        $region74: #{tpu_custom_call.1} parent=67 // pred_check_branch
          %454 = sbr.rel (%p452) target = $region76
        $region75: #{tpu_custom_call.1} parent=67 // pred_region
          %455 = dma.done %s448, 128
        $region76: #{tpu_custom_call.1} parent=67 // pred_fallthru
          _
        // Predicated region
        $region77: #{tpu_custom_call.1} parent=67 // pred_check
          %p456 = pneg %p101
        $region78: #{tpu_custom_call.1} parent=67 // pred_check_branch
          %458 = sbr.rel (%p456) target = $region80
        $region79: #{tpu_custom_call.1} parent=67 // pred_region
          %459 = dma.done [#allocation6], 2048
        $region80: #{tpu_custom_call.1} parent=67 // pred_fallthru
          _
        // Predicated region
        $region81: #{tpu_custom_call.1} parent=67 // pred_check
          %p460 = pneg %p143
        $region82: #{tpu_custom_call.1} parent=67 // pred_check_branch
          %462 = sbr.rel (%p460) target = $region84
        $region83: #{tpu_custom_call.1} parent=67 // pred_region
          %463 = dma.done [#allocation9], 4096
        $region84: #{tpu_custom_call.1} parent=67 // pred_fallthru
          _
        // Predicated region
        $region85: #{tpu_custom_call.1} parent=67 // pred_check
          %p464 = pneg %p185
        $region86: #{tpu_custom_call.1} parent=67 // pred_check_branch
          %466 = sbr.rel (%p464) target = $region88
        $region87: #{tpu_custom_call.1} parent=67 // pred_region
          %467 = dma.done [#allocation9], 2048
        $region88: #{tpu_custom_call.1} parent=67 // pred_fallthru
          _
        %s468 = sand.u32 %s41, 1
        %s469 = scalar_lea.sflag [#allocation3], %s468
        %s470 = sand.u32 %s41, 1
        %s471 = smul.addr %s470, 8
        %s472 = scalar_lea.vmem [#allocation2], %s471
        %p473 = pneg %p54
        %p474 = pneg %p51
        %s475 = sand.u32 %s33, 1
        %s476 = scalar_lea.sflag [#allocation6], %s475
        %s477 = sand.u32 %s67, 1
        %s478 = smul.addr %s477, 8
        %s479 = scalar_lea.vmem [#allocation5], %s478
        %p480 = pneg %p80
        %p481 = pneg %p77
        %p482 = pneg %p101
        %p483 = pneg %p98
        %p484 = pneg %p122
        %p485 = pneg %p119
        %p486 = pneg %p143
        %p487 = pneg %p140
        %p488 = pneg %p164
        %p489 = pneg %p161
        %p490 = pneg %p185
        %p491 = pneg %p182
        %p492 = pneg %p206
        %p493 = pneg %p203
        %p494 = pneg %p227
        %p495 = pneg %p224
        %p496 = pneg %p248
        %p497 = pneg %p245
        %p498 = pneg %p269
        %p499 = pneg %p266
        %p500 = pneg %p290
        %p501 = pneg %p287
        %p502 = pneg %p316
        %p503 = pneg %p313
        %s504 = sand.u32 %s303, 1
        %s505 = scalar_lea.sflag [#allocation4], %s504
        %s506 = sand.u32 %s303, 1
        %s507 = smul.addr %s506, 8
        %s508 = scalar_lea.vmem [#allocation11], %s507
        %v509 = vld [vmem:[%s442] sm:$0xff]
        %v510 = vld [vmem:[%s451] sm:$0xff]
        %v511 = vld [vmem:[#allocation7] sm:$0xff]
        %v512 = vld [vmem:[#allocation7 + $0x8] sm:$0xff]
        %v513 = vld [vmem:[#allocation7 + $0x10] sm:$0xff]
        %v514 = vld [vmem:[#allocation7 + $0x18] sm:$0xff]
        %v515 = vld [vmem:[#allocation7 + $0x20] sm:$0xff]
        %v516 = vld [vmem:[#allocation7 + $0x28] sm:$0xff]
        %v517 = vld [vmem:[#allocation7 + $0x30] sm:$0xff]
        %v518 = vld [vmem:[#allocation7 + $0x38] sm:$0xff]
        %v519 = vld [vmem:[#allocation7 + $0x40] sm:$0xff]
        %v520 = vld [vmem:[#allocation7 + $0x48] sm:$0xff]
        %v521 = vld [vmem:[#allocation7 + $0x50] sm:$0xff]
        %v522 = vld [vmem:[#allocation7 + $0x58] sm:$0xff]
        %v523 = vld [vmem:[#allocation7 + $0x60] sm:$0xff]
        %v524 = vld [vmem:[#allocation7 + $0x68] sm:$0xff]
        %v525 = vld [vmem:[#allocation7 + $0x70] sm:$0xff]
        %v526 = vld [vmem:[#allocation7 + $0x78] sm:$0xff]
        %v527 = vld [vmem:[#allocation8] sm:$0xff]
        %v528 = vld [vmem:[#allocation8 + $0x8] sm:$0xff]
        %v529 = vld [vmem:[#allocation8 + $0x10] sm:$0xff]
        %v530 = vld [vmem:[#allocation8 + $0x18] sm:$0xff]
        %v531 = vld [vmem:[#allocation8 + $0x20] sm:$0xff]
        %v532 = vld [vmem:[#allocation8 + $0x28] sm:$0xff]
        %v533 = vld [vmem:[#allocation8 + $0x30] sm:$0xff]
        %v534 = vld [vmem:[#allocation8 + $0x38] sm:$0xff]
        %v535 = vld [vmem:[#allocation8 + $0x40] sm:$0xff]
        %v536 = vld [vmem:[#allocation8 + $0x48] sm:$0xff]
        %v537 = vld [vmem:[#allocation8 + $0x50] sm:$0xff]
        %v538 = vld [vmem:[#allocation8 + $0x58] sm:$0xff]
        %v539 = vld [vmem:[#allocation8 + $0x60] sm:$0xff]
        %v540 = vld [vmem:[#allocation8 + $0x68] sm:$0xff]
        %v541 = vld [vmem:[#allocation8 + $0x70] sm:$0xff]
        %v542 = vld [vmem:[#allocation8 + $0x78] sm:$0xff]
        %v543 = vld [vmem:[#allocation8 + $0x80] sm:$0xff]
        %v544 = vld [vmem:[#allocation8 + $0x88] sm:$0xff]
        %v545 = vld [vmem:[#allocation8 + $0x90] sm:$0xff]
        %v546 = vld [vmem:[#allocation8 + $0x98] sm:$0xff]
        %v547 = vld [vmem:[#allocation8 + $0xa0] sm:$0xff]
        %v548 = vld [vmem:[#allocation8 + $0xa8] sm:$0xff]
        %v549 = vld [vmem:[#allocation8 + $0xb0] sm:$0xff]
        %v550 = vld [vmem:[#allocation8 + $0xb8] sm:$0xff]
        %v551 = vld [vmem:[#allocation8 + $0xc0] sm:$0xff]
        %v552 = vld [vmem:[#allocation8 + $0xc8] sm:$0xff]
        %v553 = vld [vmem:[#allocation8 + $0xd0] sm:$0xff]
        %v554 = vld [vmem:[#allocation8 + $0xd8] sm:$0xff]
        %v555 = vld [vmem:[#allocation8 + $0xe0] sm:$0xff]
        %v556 = vld [vmem:[#allocation8 + $0xe8] sm:$0xff]
        %v557 = vld [vmem:[#allocation8 + $0xf0] sm:$0xff]
        %v558 = vld [vmem:[#allocation8 + $0xf8] sm:$0xff]
        %v559 = vld [vmem:[#allocation10] sm:$0xff]
        %v560 = vld [vmem:[#allocation10 + $0x8] sm:$0xff]
        %v561 = vld [vmem:[#allocation10 + $0x10] sm:$0xff]
        %v562 = vld [vmem:[#allocation10 + $0x18] sm:$0xff]
        %v563 = vld [vmem:[#allocation10 + $0x20] sm:$0xff]
        %v564 = vld [vmem:[#allocation10 + $0x28] sm:$0xff]
        %v565 = vld [vmem:[#allocation10 + $0x30] sm:$0xff]
        %v566 = vld [vmem:[#allocation10 + $0x38] sm:$0xff]
        %v567 = vld [vmem:[#allocation10 + $0x40] sm:$0xff]
        %v568 = vld [vmem:[#allocation10 + $0x48] sm:$0xff]
        %v569 = vld [vmem:[#allocation10 + $0x50] sm:$0xff]
        %v570 = vld [vmem:[#allocation10 + $0x58] sm:$0xff]
        %v571 = vld [vmem:[#allocation10 + $0x60] sm:$0xff]
        %v572 = vld [vmem:[#allocation10 + $0x68] sm:$0xff]
        %v573 = vld [vmem:[#allocation10 + $0x70] sm:$0xff]
        %v574 = vld [vmem:[#allocation10 + $0x78] sm:$0xff]
        %v575 = vld [vmem:[%s3] sm:$0x1]
        %v577 = vlaneseq
        %v578 = vshrl.u32 %v577, 7
        %v579 = vsub.s32 0, %v578
        %v580 = vrot.slane %v575, %v579
        %582 = vmatprep.subr.mxu0 0.0
        %583 = vmatpush1.msra.mxu0 %v511
        %584 = vmatprep.subr.mxu0 0.0
        %585 = vmatpush1.msra.mxu0 %v512
        %586 = vmatprep.subr.mxu0 0.0
        %587 = vmatpush1.msra.mxu0 %v513
        %588 = vmatprep.subr.mxu0 0.0
        %589 = vmatpush1.msra.mxu0 %v514
        %590 = vmatprep.subr.mxu0 0.0
        %591 = vmatpush1.msra.mxu0 %v515
        %592 = vmatprep.subr.mxu0 0.0
        %593 = vmatpush1.msra.mxu0 %v516
        %594 = vmatprep.subr.mxu0 0.0
        %595 = vmatpush1.msra.mxu0 %v517
        %596 = vmatprep.subr.mxu0 0.0
        %597 = vmatpush1.msra.mxu0 %v518
        %598 = vmatprep.subr.mxu0 0.0
        %599 = vmatpush1.msra.mxu0 %v519
        %600 = vmatprep.subr.mxu0 0.0
        %601 = vmatpush1.msra.mxu0 %v520
        %602 = vmatprep.subr.mxu0 0.0
        %603 = vmatpush1.msra.mxu0 %v521
        %604 = vmatprep.subr.mxu0 0.0
        %605 = vmatpush1.msra.mxu0 %v522
        %606 = vmatprep.subr.mxu0 0.0
        %607 = vmatpush1.msra.mxu0 %v523
        %608 = vmatprep.subr.mxu0 0.0
        %609 = vmatpush1.msra.mxu0 %v524
        %610 = vmatprep.subr.mxu0 0.0
        %611 = vmatpush1.msra.mxu0 %v525
        %612 = vmatprep.subr.mxu0 0.0
        %613 = vmatpush1.msra.mxu0 %v526
        %614 = vmatprep.subr.mxu0 0.0
        %615 = vmatpush1.msra.mxu0 0.0
        %616 = vmatprep.subr.mxu0 0.0
        %617 = vmatpush1.msra.mxu0 0.0
        %618 = vmatprep.subr.mxu0 0.0
        %619 = vmatpush1.msra.mxu0 0.0
        %620 = vmatprep.subr.mxu0 0.0
        %621 = vmatpush1.msra.mxu0 0.0
        %622 = vmatprep.subr.mxu0 0.0
        %623 = vmatpush1.msra.mxu0 0.0
        %624 = vmatprep.subr.mxu0 0.0
        %625 = vmatpush1.msra.mxu0 0.0
        %626 = vmatprep.subr.mxu0 0.0
        %627 = vmatpush1.msra.mxu0 0.0
        %628 = vmatprep.subr.mxu0 0.0
        %629 = vmatpush1.msra.mxu0 0.0
        %630 = vmatprep.subr.mxu0 0.0
        %631 = vmatpush1.msra.mxu0 0.0
        %632 = vmatprep.subr.mxu0 0.0
        %633 = vmatpush1.msra.mxu0 0.0
        %634 = vmatprep.subr.mxu0 0.0
        %635 = vmatpush1.msra.mxu0 0.0
        %636 = vmatprep.subr.mxu0 0.0
        %637 = vmatpush1.msra.mxu0 0.0
        %638 = vmatprep.subr.mxu0 0.0
        %639 = vmatpush1.msra.mxu0 0.0
        %640 = vmatprep.subr.mxu0 0.0
        %641 = vmatpush1.msra.mxu0 0.0
        %642 = vmatprep.subr.mxu0 0.0
        %643 = vmatpush1.msra.mxu0 0.0
        %644 = vmatprep.subr.mxu0 0.0
        %645 = vmatpush1.msra.mxu0 0.0
        %646 = vmatprep.mubr.f32.mxu0 0.0
        %647 = vmatmul.mubr.f32.gmra.mrb[0].mxu0 %v509
        %v648 = vpop.f32.mrb[0].mxu0
        %v649 = vadd.f32 %v580, %v648
        %v650 = vpop.f32.mrb[0].mxu0
        %651 = vdwg.mxu0
        %v652 = vld [vmem:[%s5] sm:$0x3]
        %v654 = vlaneseq
        %v655 = vshrl.u32 %v654, 7
        %v656 = vsub.s32 0, %v655
        %v657 = vrot.slane %v652, %v656
        %v658 = vlaneseq
        %v659 = vshrl.u32 %v658, 7
        %v660 = vsub.s32 1, %v659
        %v661 = vrot.slane %v652, %v660
        %664 = vmatprep.subr.mxu0 %v528
        %665 = vmatpush1.msra.mxu0 %v527
        %666 = vmatprep.subr.mxu0 %v530
        %667 = vmatpush1.msra.mxu0 %v529
        %668 = vmatprep.subr.mxu0 %v532
        %669 = vmatpush1.msra.mxu0 %v531
        %670 = vmatprep.subr.mxu0 %v534
        %671 = vmatpush1.msra.mxu0 %v533
        %672 = vmatprep.subr.mxu0 %v536
        %673 = vmatpush1.msra.mxu0 %v535
        %674 = vmatprep.subr.mxu0 %v538
        %675 = vmatpush1.msra.mxu0 %v537
        %676 = vmatprep.subr.mxu0 %v540
        %677 = vmatpush1.msra.mxu0 %v539
        %678 = vmatprep.subr.mxu0 %v542
        %679 = vmatpush1.msra.mxu0 %v541
        %680 = vmatprep.subr.mxu0 %v544
        %681 = vmatpush1.msra.mxu0 %v543
        %682 = vmatprep.subr.mxu0 %v546
        %683 = vmatpush1.msra.mxu0 %v545
        %684 = vmatprep.subr.mxu0 %v548
        %685 = vmatpush1.msra.mxu0 %v547
        %686 = vmatprep.subr.mxu0 %v550
        %687 = vmatpush1.msra.mxu0 %v549
        %688 = vmatprep.subr.mxu0 %v552
        %689 = vmatpush1.msra.mxu0 %v551
        %690 = vmatprep.subr.mxu0 %v554
        %691 = vmatpush1.msra.mxu0 %v553
        %692 = vmatprep.subr.mxu0 %v556
        %693 = vmatpush1.msra.mxu0 %v555
        %694 = vmatprep.subr.mxu0 %v558
        %695 = vmatpush1.msra.mxu0 %v557
        %696 = vmatprep.subr.mxu0 0.0
        %697 = vmatpush1.msra.mxu0 0.0
        %698 = vmatprep.subr.mxu0 0.0
        %699 = vmatpush1.msra.mxu0 0.0
        %700 = vmatprep.subr.mxu0 0.0
        %701 = vmatpush1.msra.mxu0 0.0
        %702 = vmatprep.subr.mxu0 0.0
        %703 = vmatpush1.msra.mxu0 0.0
        %704 = vmatprep.subr.mxu0 0.0
        %705 = vmatpush1.msra.mxu0 0.0
        %706 = vmatprep.subr.mxu0 0.0
        %707 = vmatpush1.msra.mxu0 0.0
        %708 = vmatprep.subr.mxu0 0.0
        %709 = vmatpush1.msra.mxu0 0.0
        %710 = vmatprep.subr.mxu0 0.0
        %711 = vmatpush1.msra.mxu0 0.0
        %712 = vmatprep.subr.mxu0 0.0
        %713 = vmatpush1.msra.mxu0 0.0
        %714 = vmatprep.subr.mxu0 0.0
        %715 = vmatpush1.msra.mxu0 0.0
        %716 = vmatprep.subr.mxu0 0.0
        %717 = vmatpush1.msra.mxu0 0.0
        %718 = vmatprep.subr.mxu0 0.0
        %719 = vmatpush1.msra.mxu0 0.0
        %720 = vmatprep.subr.mxu0 0.0
        %721 = vmatpush1.msra.mxu0 0.0
        %722 = vmatprep.subr.mxu0 0.0
        %723 = vmatpush1.msra.mxu0 0.0
        %724 = vmatprep.subr.mxu0 0.0
        %725 = vmatpush1.msra.mxu0 0.0
        %726 = vmatprep.subr.mxu0 0.0
        %727 = vmatpush1.msra.mxu0 0.0
        %728 = vmatprep.mubr.f32.mxu0 0.0
        %729 = vmatmul.mubr.f32.gmra.mrb[0].mxu0 %v510
        %v730 = vpop.f32.mrb[0].mxu0
        %v731 = vadd.f32 %v657, %v730
        %v732 = vpop.f32.mrb[0].mxu0
        %v733 = vadd.f32 %v661, %v732
        %734 = vdwg.mxu0
        %vm735 = vcmask 261120
        %v737 = vsel %vm735, %v649, 0
        %v740 = vsel %vm735, %v731, 0
        %742 = vmatprep.subr.mxu0 0.0
        %743 = vmatpush1.xpose.msra.mxu0 %v740
        %744 = vmatprep.subr.mxu0 0.0
        %745 = vmatpush1.xpose.msra.mxu0 0.0
        %746 = vmatprep.subr.mxu0 0.0
        %747 = vmatpush1.xpose.msra.mxu0 0.0
        %748 = vmatprep.subr.mxu0 0.0
        %749 = vmatpush1.xpose.msra.mxu0 0.0
        %750 = vmatprep.subr.mxu0 0.0
        %751 = vmatpush1.xpose.msra.mxu0 0.0
        %752 = vmatprep.subr.mxu0 0.0
        %753 = vmatpush1.xpose.msra.mxu0 0.0
        %754 = vmatprep.subr.mxu0 0.0
        %755 = vmatpush1.xpose.msra.mxu0 0.0
        %756 = vmatprep.subr.mxu0 0.0
        %757 = vmatpush1.xpose.msra.mxu0 0.0
        %758 = vmatprep.subr.mxu0 0.0
        %759 = vmatpush1.xpose.msra.mxu0 0.0
        %760 = vmatprep.subr.mxu0 0.0
        %761 = vmatpush1.xpose.msra.mxu0 0.0
        %762 = vmatprep.subr.mxu0 0.0
        %763 = vmatpush1.xpose.msra.mxu0 0.0
        %764 = vmatprep.subr.mxu0 0.0
        %765 = vmatpush1.xpose.msra.mxu0 0.0
        %766 = vmatprep.subr.mxu0 0.0
        %767 = vmatpush1.xpose.msra.mxu0 0.0
        %768 = vmatprep.subr.mxu0 0.0
        %769 = vmatpush1.xpose.msra.mxu0 0.0
        %770 = vmatprep.subr.mxu0 0.0
        %771 = vmatpush1.xpose.msra.mxu0 0.0
        %772 = vmatprep.subr.mxu0 0.0
        %773 = vmatpush1.xpose.msra.mxu0 0.0
        %774 = vmatprep.subr.mxu0 0.0
        %775 = vmatpush1.xpose.msra.mxu0 0.0
        %776 = vmatprep.subr.mxu0 0.0
        %777 = vmatpush1.xpose.msra.mxu0 0.0
        %778 = vmatprep.subr.mxu0 0.0
        %779 = vmatpush1.xpose.msra.mxu0 0.0
        %780 = vmatprep.subr.mxu0 0.0
        %781 = vmatpush1.xpose.msra.mxu0 0.0
        %782 = vmatprep.subr.mxu0 0.0
        %783 = vmatpush1.xpose.msra.mxu0 0.0
        %784 = vmatprep.subr.mxu0 0.0
        %785 = vmatpush1.xpose.msra.mxu0 0.0
        %786 = vmatprep.subr.mxu0 0.0
        %787 = vmatpush1.xpose.msra.mxu0 0.0
        %788 = vmatprep.subr.mxu0 0.0
        %789 = vmatpush1.xpose.msra.mxu0 0.0
        %790 = vmatprep.subr.mxu0 0.0
        %791 = vmatpush1.xpose.msra.mxu0 0.0
        %792 = vmatprep.subr.mxu0 0.0
        %793 = vmatpush1.xpose.msra.mxu0 0.0
        %794 = vmatprep.subr.mxu0 0.0
        %795 = vmatpush1.xpose.msra.mxu0 0.0
        %796 = vmatprep.subr.mxu0 0.0
        %797 = vmatpush1.xpose.msra.mxu0 0.0
        %798 = vmatprep.subr.mxu0 0.0
        %799 = vmatpush1.xpose.msra.mxu0 0.0
        %800 = vmatprep.subr.mxu0 0.0
        %801 = vmatpush1.xpose.msra.mxu0 0.0
        %802 = vmatprep.subr.mxu0 0.0
        %803 = vmatpush1.xpose.msra.mxu0 0.0
        %804 = vmatprep.subr.mxu0 0.0
        %805 = vmatpush1.xpose.msra.mxu0 0.0
        %806 = vmatprep.mubr.f32.mxu0 0.0
        %807 = vmatmul.mubr.f32.gmra.mrb[0].mxu0 %v737
        %v808 = vpop.f32.mrb[0].mxu0
        %v809 = vadd.f32 0.0, %v808
        %v810 = vpop.f32.mrb[0].mxu0
        %811 = vdwg.mxu0
        %v812 = vmul.f32 %v809, 0.17677669
        %vm813 = vcmask 64512
        %v814 = vsel %vm813, %v812, -inf
        %815 = vmax.xlane.f32.xlu0 %v814
        %v816 = vpop.xlane.xlu0 %815
        %v817 = vsub.f32 %v812, %v816
        %v818 = vmul.f32 %v817, 1.442695
        %v819 = vpow.pop %v818
        %v820 = vsel %vm813, %v819, 0.0
        %821 = vadd.xlane.f32.xlu0 %v820
        %v822 = vpop.xlane.xlu0 %821
        %v823 = vrcp.pop %v822
        %v824 = vmul.f32 %v819, %v823
        %v826 = vsel %vm813, %v824, 0
        %828 = vmatprep.subr.mxu0 0.0
        %829 = vmatpush1.msra.mxu0 %v733
        %830 = vmatprep.subr.mxu0 0.0
        %831 = vmatpush1.msra.mxu0 0.0
        %832 = vmatprep.subr.mxu0 0.0
        %833 = vmatpush1.msra.mxu0 0.0
        %834 = vmatprep.subr.mxu0 0.0
        %835 = vmatpush1.msra.mxu0 0.0
        %836 = vmatprep.subr.mxu0 0.0
        %837 = vmatpush1.msra.mxu0 0.0
        %838 = vmatprep.subr.mxu0 0.0
        %839 = vmatpush1.msra.mxu0 0.0
        %840 = vmatprep.subr.mxu0 0.0
        %841 = vmatpush1.msra.mxu0 0.0
        %842 = vmatprep.subr.mxu0 0.0
        %843 = vmatpush1.msra.mxu0 0.0
        %844 = vmatprep.subr.mxu0 0.0
        %845 = vmatpush1.msra.mxu0 0.0
        %846 = vmatprep.subr.mxu0 0.0
        %847 = vmatpush1.msra.mxu0 0.0
        %848 = vmatprep.subr.mxu0 0.0
        %849 = vmatpush1.msra.mxu0 0.0
        %850 = vmatprep.subr.mxu0 0.0
        %851 = vmatpush1.msra.mxu0 0.0
        %852 = vmatprep.subr.mxu0 0.0
        %853 = vmatpush1.msra.mxu0 0.0
        %854 = vmatprep.subr.mxu0 0.0
        %855 = vmatpush1.msra.mxu0 0.0
        %856 = vmatprep.subr.mxu0 0.0
        %857 = vmatpush1.msra.mxu0 0.0
        %858 = vmatprep.subr.mxu0 0.0
        %859 = vmatpush1.msra.mxu0 0.0
        %860 = vmatprep.subr.mxu0 0.0
        %861 = vmatpush1.msra.mxu0 0.0
        %862 = vmatprep.subr.mxu0 0.0
        %863 = vmatpush1.msra.mxu0 0.0
        %864 = vmatprep.subr.mxu0 0.0
        %865 = vmatpush1.msra.mxu0 0.0
        %866 = vmatprep.subr.mxu0 0.0
        %867 = vmatpush1.msra.mxu0 0.0
        %868 = vmatprep.subr.mxu0 0.0
        %869 = vmatpush1.msra.mxu0 0.0
        %870 = vmatprep.subr.mxu0 0.0
        %871 = vmatpush1.msra.mxu0 0.0
        %872 = vmatprep.subr.mxu0 0.0
        %873 = vmatpush1.msra.mxu0 0.0
        %874 = vmatprep.subr.mxu0 0.0
        %875 = vmatpush1.msra.mxu0 0.0
        %876 = vmatprep.subr.mxu0 0.0
        %877 = vmatpush1.msra.mxu0 0.0
        %878 = vmatprep.subr.mxu0 0.0
        %879 = vmatpush1.msra.mxu0 0.0
        %880 = vmatprep.subr.mxu0 0.0
        %881 = vmatpush1.msra.mxu0 0.0
        %882 = vmatprep.subr.mxu0 0.0
        %883 = vmatpush1.msra.mxu0 0.0
        %884 = vmatprep.subr.mxu0 0.0
        %885 = vmatpush1.msra.mxu0 0.0
        %886 = vmatprep.subr.mxu0 0.0
        %887 = vmatpush1.msra.mxu0 0.0
        %888 = vmatprep.subr.mxu0 0.0
        %889 = vmatpush1.msra.mxu0 0.0
        %890 = vmatprep.subr.mxu0 0.0
        %891 = vmatpush1.msra.mxu0 0.0
        %892 = vmatprep.mubr.f32.mxu0 0.0
        %893 = vmatmul.mubr.f32.gmra.mrb[0].mxu0 %v826
        %v894 = vpop.f32.mrb[0].mxu0
        %v895 = vadd.f32 0.0, %v894
        %v896 = vpop.f32.mrb[0].mxu0
        %897 = vdwg.mxu0
        %898 = vrot.lane.b32.xlu0 %v649, 96
        %v899 = vpop.permute.xlu0 %898
        %900 = vrot.lane.b32.xlu0 %v731, 96
        %v901 = vpop.permute.xlu0 %900
        %v902 = vsel %vm735, %v899, 0
        %v904 = vsel %vm735, %v901, 0
        %906 = vmatprep.subr.mxu0 0.0
        %907 = vmatpush1.xpose.msra.mxu0 %v904
        %908 = vmatprep.subr.mxu0 0.0
        %909 = vmatpush1.xpose.msra.mxu0 0.0
        %910 = vmatprep.subr.mxu0 0.0
        %911 = vmatpush1.xpose.msra.mxu0 0.0
        %912 = vmatprep.subr.mxu0 0.0
        %913 = vmatpush1.xpose.msra.mxu0 0.0
        %914 = vmatprep.subr.mxu0 0.0
        %915 = vmatpush1.xpose.msra.mxu0 0.0
        %916 = vmatprep.subr.mxu0 0.0
        %917 = vmatpush1.xpose.msra.mxu0 0.0
        %918 = vmatprep.subr.mxu0 0.0
        %919 = vmatpush1.xpose.msra.mxu0 0.0
        %920 = vmatprep.subr.mxu0 0.0
        %921 = vmatpush1.xpose.msra.mxu0 0.0
        %922 = vmatprep.subr.mxu0 0.0
        %923 = vmatpush1.xpose.msra.mxu0 0.0
        %924 = vmatprep.subr.mxu0 0.0
        %925 = vmatpush1.xpose.msra.mxu0 0.0
        %926 = vmatprep.subr.mxu0 0.0
        %927 = vmatpush1.xpose.msra.mxu0 0.0
        %928 = vmatprep.subr.mxu0 0.0
        %929 = vmatpush1.xpose.msra.mxu0 0.0
        %930 = vmatprep.subr.mxu0 0.0
        %931 = vmatpush1.xpose.msra.mxu0 0.0
        %932 = vmatprep.subr.mxu0 0.0
        %933 = vmatpush1.xpose.msra.mxu0 0.0
        %934 = vmatprep.subr.mxu0 0.0
        %935 = vmatpush1.xpose.msra.mxu0 0.0
        %936 = vmatprep.subr.mxu0 0.0
        %937 = vmatpush1.xpose.msra.mxu0 0.0
        %938 = vmatprep.subr.mxu0 0.0
        %939 = vmatpush1.xpose.msra.mxu0 0.0
        %940 = vmatprep.subr.mxu0 0.0
        %941 = vmatpush1.xpose.msra.mxu0 0.0
        %942 = vmatprep.subr.mxu0 0.0
        %943 = vmatpush1.xpose.msra.mxu0 0.0
        %944 = vmatprep.subr.mxu0 0.0
        %945 = vmatpush1.xpose.msra.mxu0 0.0
        %946 = vmatprep.subr.mxu0 0.0
        %947 = vmatpush1.xpose.msra.mxu0 0.0
        %948 = vmatprep.subr.mxu0 0.0
        %949 = vmatpush1.xpose.msra.mxu0 0.0
        %950 = vmatprep.subr.mxu0 0.0
        %951 = vmatpush1.xpose.msra.mxu0 0.0
        %952 = vmatprep.subr.mxu0 0.0
        %953 = vmatpush1.xpose.msra.mxu0 0.0
        %954 = vmatprep.subr.mxu0 0.0
        %955 = vmatpush1.xpose.msra.mxu0 0.0
        %956 = vmatprep.subr.mxu0 0.0
        %957 = vmatpush1.xpose.msra.mxu0 0.0
        %958 = vmatprep.subr.mxu0 0.0
        %959 = vmatpush1.xpose.msra.mxu0 0.0
        %960 = vmatprep.subr.mxu0 0.0
        %961 = vmatpush1.xpose.msra.mxu0 0.0
        %962 = vmatprep.subr.mxu0 0.0
        %963 = vmatpush1.xpose.msra.mxu0 0.0
        %964 = vmatprep.subr.mxu0 0.0
        %965 = vmatpush1.xpose.msra.mxu0 0.0
        %966 = vmatprep.subr.mxu0 0.0
        %967 = vmatpush1.xpose.msra.mxu0 0.0
        %968 = vmatprep.subr.mxu0 0.0
        %969 = vmatpush1.xpose.msra.mxu0 0.0
        %970 = vmatprep.mubr.f32.mxu0 0.0
        %971 = vmatmul.mubr.f32.gmra.mrb[0].mxu0 %v902
        %v972 = vpop.f32.mrb[0].mxu0
        %v973 = vadd.f32 0.0, %v972
        %v974 = vpop.f32.mrb[0].mxu0
        %975 = vdwg.mxu0
        %v976 = vmul.f32 %v973, 0.17677669
        %v977 = vsel %vm813, %v976, -inf
        %978 = vmax.xlane.f32.xlu0 %v977
        %v979 = vpop.xlane.xlu0 %978
        %v980 = vsub.f32 %v976, %v979
        %v981 = vmul.f32 %v980, 1.442695
        %v982 = vpow.pop %v981
        %v983 = vsel %vm813, %v982, 0.0
        %984 = vadd.xlane.f32.xlu0 %v983
        %v985 = vpop.xlane.xlu0 %984
        %v986 = vrcp.pop %v985
        %v987 = vmul.f32 %v982, %v986
        %989 = vrot.lane.b32.xlu0 %v733, 96
        %v990 = vpop.permute.xlu0 %989
        %v993 = vsel %vm813, %v987, 0
        %995 = vmatprep.subr.mxu0 0.0
        %996 = vmatpush1.msra.mxu0 %v990
        %997 = vmatprep.subr.mxu0 0.0
        %998 = vmatpush1.msra.mxu0 0.0
        %999 = vmatprep.subr.mxu0 0.0
        %1000 = vmatpush1.msra.mxu0 0.0
        %1001 = vmatprep.subr.mxu0 0.0
        %1002 = vmatpush1.msra.mxu0 0.0
        %1003 = vmatprep.subr.mxu0 0.0
        %1004 = vmatpush1.msra.mxu0 0.0
        %1005 = vmatprep.subr.mxu0 0.0
        %1006 = vmatpush1.msra.mxu0 0.0
        %1007 = vmatprep.subr.mxu0 0.0
        %1008 = vmatpush1.msra.mxu0 0.0
        %1009 = vmatprep.subr.mxu0 0.0
        %1010 = vmatpush1.msra.mxu0 0.0
        %1011 = vmatprep.subr.mxu0 0.0
        %1012 = vmatpush1.msra.mxu0 0.0
        %1013 = vmatprep.subr.mxu0 0.0
        %1014 = vmatpush1.msra.mxu0 0.0
        %1015 = vmatprep.subr.mxu0 0.0
        %1016 = vmatpush1.msra.mxu0 0.0
        %1017 = vmatprep.subr.mxu0 0.0
        %1018 = vmatpush1.msra.mxu0 0.0
        %1019 = vmatprep.subr.mxu0 0.0
        %1020 = vmatpush1.msra.mxu0 0.0
        %1021 = vmatprep.subr.mxu0 0.0
        %1022 = vmatpush1.msra.mxu0 0.0
        %1023 = vmatprep.subr.mxu0 0.0
        %1024 = vmatpush1.msra.mxu0 0.0
        %1025 = vmatprep.subr.mxu0 0.0
        %1026 = vmatpush1.msra.mxu0 0.0
        %1027 = vmatprep.subr.mxu0 0.0
        %1028 = vmatpush1.msra.mxu0 0.0
        %1029 = vmatprep.subr.mxu0 0.0
        %1030 = vmatpush1.msra.mxu0 0.0
        %1031 = vmatprep.subr.mxu0 0.0
        %1032 = vmatpush1.msra.mxu0 0.0
        %1033 = vmatprep.subr.mxu0 0.0
        %1034 = vmatpush1.msra.mxu0 0.0
        %1035 = vmatprep.subr.mxu0 0.0
        %1036 = vmatpush1.msra.mxu0 0.0
        %1037 = vmatprep.subr.mxu0 0.0
        %1038 = vmatpush1.msra.mxu0 0.0
        %1039 = vmatprep.subr.mxu0 0.0
        %1040 = vmatpush1.msra.mxu0 0.0
        %1041 = vmatprep.subr.mxu0 0.0
        %1042 = vmatpush1.msra.mxu0 0.0
        %1043 = vmatprep.subr.mxu0 0.0
        %1044 = vmatpush1.msra.mxu0 0.0
        %1045 = vmatprep.subr.mxu0 0.0
        %1046 = vmatpush1.msra.mxu0 0.0
        %1047 = vmatprep.subr.mxu0 0.0
        %1048 = vmatpush1.msra.mxu0 0.0
        %1049 = vmatprep.subr.mxu0 0.0
        %1050 = vmatpush1.msra.mxu0 0.0
        %1051 = vmatprep.subr.mxu0 0.0
        %1052 = vmatpush1.msra.mxu0 0.0
        %1053 = vmatprep.subr.mxu0 0.0
        %1054 = vmatpush1.msra.mxu0 0.0
        %1055 = vmatprep.subr.mxu0 0.0
        %1056 = vmatpush1.msra.mxu0 0.0
        %1057 = vmatprep.subr.mxu0 0.0
        %1058 = vmatpush1.msra.mxu0 0.0
        %1059 = vmatprep.mubr.f32.mxu0 0.0
        %1060 = vmatmul.mubr.f32.gmra.mrb[0].mxu0 %v993
        %v1061 = vpop.f32.mrb[0].mxu0
        %v1062 = vadd.f32 0.0, %v1061
        %v1063 = vpop.f32.mrb[0].mxu0
        %1064 = vdwg.mxu0
        %v1066 = vsel %vm735, %v1062, 0
        %1068 = vmatprep.subr.mxu0 0.0
        %1069 = vmatpush1.msra.mxu0 %v563
        %1070 = vmatprep.subr.mxu0 0.0
        %1071 = vmatpush1.msra.mxu0 %v564
        %1072 = vmatprep.subr.mxu0 0.0
        %1073 = vmatpush1.msra.mxu0 %v565
        %1074 = vmatprep.subr.mxu0 0.0
        %1075 = vmatpush1.msra.mxu0 %v566
        %1076 = vmatprep.subr.mxu0 0.0
        %1077 = vmatpush1.msra.mxu0 0.0
        %1078 = vmatprep.subr.mxu0 0.0
        %1079 = vmatpush1.msra.mxu0 0.0
        %1080 = vmatprep.subr.mxu0 0.0
        %1081 = vmatpush1.msra.mxu0 0.0
        %1082 = vmatprep.subr.mxu0 0.0
        %1083 = vmatpush1.msra.mxu0 0.0
        %1084 = vmatprep.subr.mxu0 0.0
        %1085 = vmatpush1.msra.mxu0 0.0
        %1086 = vmatprep.subr.mxu0 0.0
        %1087 = vmatpush1.msra.mxu0 0.0
        %1088 = vmatprep.subr.mxu0 0.0
        %1089 = vmatpush1.msra.mxu0 0.0
        %1090 = vmatprep.subr.mxu0 0.0
        %1091 = vmatpush1.msra.mxu0 0.0
        %1092 = vmatprep.subr.mxu0 0.0
        %1093 = vmatpush1.msra.mxu0 0.0
        %1094 = vmatprep.subr.mxu0 0.0
        %1095 = vmatpush1.msra.mxu0 0.0
        %1096 = vmatprep.subr.mxu0 0.0
        %1097 = vmatpush1.msra.mxu0 0.0
        %1098 = vmatprep.subr.mxu0 0.0
        %1099 = vmatpush1.msra.mxu0 0.0
        %1100 = vmatprep.subr.mxu0 0.0
        %1101 = vmatpush1.msra.mxu0 0.0
        %1102 = vmatprep.subr.mxu0 0.0
        %1103 = vmatpush1.msra.mxu0 0.0
        %1104 = vmatprep.subr.mxu0 0.0
        %1105 = vmatpush1.msra.mxu0 0.0
        %1106 = vmatprep.subr.mxu0 0.0
        %1107 = vmatpush1.msra.mxu0 0.0
        %1108 = vmatprep.subr.mxu0 0.0
        %1109 = vmatpush1.msra.mxu0 0.0
        %1110 = vmatprep.subr.mxu0 0.0
        %1111 = vmatpush1.msra.mxu0 0.0
        %1112 = vmatprep.subr.mxu0 0.0
        %1113 = vmatpush1.msra.mxu0 0.0
        %1114 = vmatprep.subr.mxu0 0.0
        %1115 = vmatpush1.msra.mxu0 0.0
        %1116 = vmatprep.subr.mxu0 0.0
        %1117 = vmatpush1.msra.mxu0 0.0
        %1118 = vmatprep.subr.mxu0 0.0
        %1119 = vmatpush1.msra.mxu0 0.0
        %1120 = vmatprep.subr.mxu0 0.0
        %1121 = vmatpush1.msra.mxu0 0.0
        %1122 = vmatprep.subr.mxu0 0.0
        %1123 = vmatpush1.msra.mxu0 0.0
        %1124 = vmatprep.subr.mxu0 0.0
        %1125 = vmatpush1.msra.mxu0 0.0
        %1126 = vmatprep.subr.mxu0 0.0
        %1127 = vmatpush1.msra.mxu0 0.0
        %1128 = vmatprep.subr.mxu0 0.0
        %1129 = vmatpush1.msra.mxu0 0.0
        %1130 = vmatprep.subr.mxu0 0.0
        %1131 = vmatpush1.msra.mxu0 0.0
        %1132 = vmatprep.mubr.f32.mxu0 0.0
        %1133 = vmatmul.mubr.f32.gmra.mrb[0].mxu0 %v1066
        %v1134 = vpop.f32.mrb[0].mxu0
        %v1135 = vadd.f32 0.0, %v1134
        %v1136 = vpop.f32.mrb[0].mxu0
        %1137 = vdwg.mxu0
        %v1139 = vsel %vm735, %v895, 0
        %1141 = vmatprep.subr.mxu0 0.0
        %1142 = vmatpush1.msra.mxu0 %v559
        %1143 = vmatprep.subr.mxu0 0.0
        %1144 = vmatpush1.msra.mxu0 %v560
        %1145 = vmatprep.subr.mxu0 0.0
        %1146 = vmatpush1.msra.mxu0 %v561
        %1147 = vmatprep.subr.mxu0 0.0
        %1148 = vmatpush1.msra.mxu0 %v562
        %1149 = vmatprep.subr.mxu0 0.0
        %1150 = vmatpush1.msra.mxu0 0.0
        %1151 = vmatprep.subr.mxu0 0.0
        %1152 = vmatpush1.msra.mxu0 0.0
        %1153 = vmatprep.subr.mxu0 0.0
        %1154 = vmatpush1.msra.mxu0 0.0
        %1155 = vmatprep.subr.mxu0 0.0
        %1156 = vmatpush1.msra.mxu0 0.0
        %1157 = vmatprep.subr.mxu0 0.0
        %1158 = vmatpush1.msra.mxu0 0.0
        %1159 = vmatprep.subr.mxu0 0.0
        %1160 = vmatpush1.msra.mxu0 0.0
        %1161 = vmatprep.subr.mxu0 0.0
        %1162 = vmatpush1.msra.mxu0 0.0
        %1163 = vmatprep.subr.mxu0 0.0
        %1164 = vmatpush1.msra.mxu0 0.0
        %1165 = vmatprep.subr.mxu0 0.0
        %1166 = vmatpush1.msra.mxu0 0.0
        %1167 = vmatprep.subr.mxu0 0.0
        %1168 = vmatpush1.msra.mxu0 0.0
        %1169 = vmatprep.subr.mxu0 0.0
        %1170 = vmatpush1.msra.mxu0 0.0
        %1171 = vmatprep.subr.mxu0 0.0
        %1172 = vmatpush1.msra.mxu0 0.0
        %1173 = vmatprep.subr.mxu0 0.0
        %1174 = vmatpush1.msra.mxu0 0.0
        %1175 = vmatprep.subr.mxu0 0.0
        %1176 = vmatpush1.msra.mxu0 0.0
        %1177 = vmatprep.subr.mxu0 0.0
        %1178 = vmatpush1.msra.mxu0 0.0
        %1179 = vmatprep.subr.mxu0 0.0
        %1180 = vmatpush1.msra.mxu0 0.0
        %1181 = vmatprep.subr.mxu0 0.0
        %1182 = vmatpush1.msra.mxu0 0.0
        %1183 = vmatprep.subr.mxu0 0.0
        %1184 = vmatpush1.msra.mxu0 0.0
        %1185 = vmatprep.subr.mxu0 0.0
        %1186 = vmatpush1.msra.mxu0 0.0
        %1187 = vmatprep.subr.mxu0 0.0
        %1188 = vmatpush1.msra.mxu0 0.0
        %1189 = vmatprep.subr.mxu0 0.0
        %1190 = vmatpush1.msra.mxu0 0.0
        %1191 = vmatprep.subr.mxu0 0.0
        %1192 = vmatpush1.msra.mxu0 0.0
        %1193 = vmatprep.subr.mxu0 0.0
        %1194 = vmatpush1.msra.mxu0 0.0
        %1195 = vmatprep.subr.mxu0 0.0
        %1196 = vmatpush1.msra.mxu0 0.0
        %1197 = vmatprep.subr.mxu0 0.0
        %1198 = vmatpush1.msra.mxu0 0.0
        %1199 = vmatprep.subr.mxu0 0.0
        %1200 = vmatpush1.msra.mxu0 0.0
        %1201 = vmatprep.subr.mxu0 0.0
        %1202 = vmatpush1.msra.mxu0 0.0
        %1203 = vmatprep.subr.mxu0 0.0
        %1204 = vmatpush1.msra.mxu0 0.0
        %1205 = vmatprep.mubr.f32.mxu0 0.0
        %1206 = vmatmul.mubr.f32.gmra.mrb[0].mxu0 %v1139
        %v1207 = vpop.f32.mrb[0].mxu0
        %v1208 = vadd.f32 %v1135, %v1207
        %v1209 = vpop.f32.mrb[0].mxu0
        %1210 = vdwg.mxu0
        %1211 = vrot.lane.b32.xlu0 %v649, 64
        %v1212 = vpop.permute.xlu0 %1211
        %1213 = vrot.lane.b32.xlu0 %v731, 64
        %v1214 = vpop.permute.xlu0 %1213
        %v1215 = vsel %vm735, %v1212, 0
        %v1217 = vsel %vm735, %v1214, 0
        %1219 = vmatprep.subr.mxu0 0.0
        %1220 = vmatpush1.xpose.msra.mxu0 %v1217
        %1221 = vmatprep.subr.mxu0 0.0
        %1222 = vmatpush1.xpose.msra.mxu0 0.0
        %1223 = vmatprep.subr.mxu0 0.0
        %1224 = vmatpush1.xpose.msra.mxu0 0.0
        %1225 = vmatprep.subr.mxu0 0.0
        %1226 = vmatpush1.xpose.msra.mxu0 0.0
        %1227 = vmatprep.subr.mxu0 0.0
        %1228 = vmatpush1.xpose.msra.mxu0 0.0
        %1229 = vmatprep.subr.mxu0 0.0
        %1230 = vmatpush1.xpose.msra.mxu0 0.0
        %1231 = vmatprep.subr.mxu0 0.0
        %1232 = vmatpush1.xpose.msra.mxu0 0.0
        %1233 = vmatprep.subr.mxu0 0.0
        %1234 = vmatpush1.xpose.msra.mxu0 0.0
        %1235 = vmatprep.subr.mxu0 0.0
        %1236 = vmatpush1.xpose.msra.mxu0 0.0
        %1237 = vmatprep.subr.mxu0 0.0
        %1238 = vmatpush1.xpose.msra.mxu0 0.0
        %1239 = vmatprep.subr.mxu0 0.0
        %1240 = vmatpush1.xpose.msra.mxu0 0.0
        %1241 = vmatprep.subr.mxu0 0.0
        %1242 = vmatpush1.xpose.msra.mxu0 0.0
        %1243 = vmatprep.subr.mxu0 0.0
        %1244 = vmatpush1.xpose.msra.mxu0 0.0
        %1245 = vmatprep.subr.mxu0 0.0
        %1246 = vmatpush1.xpose.msra.mxu0 0.0
        %1247 = vmatprep.subr.mxu0 0.0
        %1248 = vmatpush1.xpose.msra.mxu0 0.0
        %1249 = vmatprep.subr.mxu0 0.0
        %1250 = vmatpush1.xpose.msra.mxu0 0.0
        %1251 = vmatprep.subr.mxu0 0.0
        %1252 = vmatpush1.xpose.msra.mxu0 0.0
        %1253 = vmatprep.subr.mxu0 0.0
        %1254 = vmatpush1.xpose.msra.mxu0 0.0
        %1255 = vmatprep.subr.mxu0 0.0
        %1256 = vmatpush1.xpose.msra.mxu0 0.0
        %1257 = vmatprep.subr.mxu0 0.0
        %1258 = vmatpush1.xpose.msra.mxu0 0.0
        %1259 = vmatprep.subr.mxu0 0.0
        %1260 = vmatpush1.xpose.msra.mxu0 0.0
        %1261 = vmatprep.subr.mxu0 0.0
        %1262 = vmatpush1.xpose.msra.mxu0 0.0
        %1263 = vmatprep.subr.mxu0 0.0
        %1264 = vmatpush1.xpose.msra.mxu0 0.0
        %1265 = vmatprep.subr.mxu0 0.0
        %1266 = vmatpush1.xpose.msra.mxu0 0.0
        %1267 = vmatprep.subr.mxu0 0.0
        %1268 = vmatpush1.xpose.msra.mxu0 0.0
        %1269 = vmatprep.subr.mxu0 0.0
        %1270 = vmatpush1.xpose.msra.mxu0 0.0
        %1271 = vmatprep.subr.mxu0 0.0
        %1272 = vmatpush1.xpose.msra.mxu0 0.0
        %1273 = vmatprep.subr.mxu0 0.0
        %1274 = vmatpush1.xpose.msra.mxu0 0.0
        %1275 = vmatprep.subr.mxu0 0.0
        %1276 = vmatpush1.xpose.msra.mxu0 0.0
        %1277 = vmatprep.subr.mxu0 0.0
        %1278 = vmatpush1.xpose.msra.mxu0 0.0
        %1279 = vmatprep.subr.mxu0 0.0
        %1280 = vmatpush1.xpose.msra.mxu0 0.0
        %1281 = vmatprep.subr.mxu0 0.0
        %1282 = vmatpush1.xpose.msra.mxu0 0.0
        %1283 = vmatprep.mubr.f32.mxu0 0.0
        %1284 = vmatmul.mubr.f32.gmra.mrb[0].mxu0 %v1215
        %v1285 = vpop.f32.mrb[0].mxu0
        %v1286 = vadd.f32 0.0, %v1285
        %v1287 = vpop.f32.mrb[0].mxu0
        %1288 = vdwg.mxu0
        %v1289 = vmul.f32 %v1286, 0.17677669
        %v1290 = vsel %vm813, %v1289, -inf
        %1291 = vmax.xlane.f32.xlu0 %v1290
        %v1292 = vpop.xlane.xlu0 %1291
        %v1293 = vsub.f32 %v1289, %v1292
        %v1294 = vmul.f32 %v1293, 1.442695
        %v1295 = vpow.pop %v1294
        %v1296 = vsel %vm813, %v1295, 0.0
        %1297 = vadd.xlane.f32.xlu0 %v1296
        %v1298 = vpop.xlane.xlu0 %1297
        %v1299 = vrcp.pop %v1298
        %v1300 = vmul.f32 %v1295, %v1299
        %1301 = vrot.lane.b32.xlu0 %v733, 64
        %v1302 = vpop.permute.xlu0 %1301
        %v1305 = vsel %vm813, %v1300, 0
        %1307 = vmatprep.subr.mxu0 0.0
        %1308 = vmatpush1.msra.mxu0 %v1302
        %1309 = vmatprep.subr.mxu0 0.0
        %1310 = vmatpush1.msra.mxu0 0.0
        %1311 = vmatprep.subr.mxu0 0.0
        %1312 = vmatpush1.msra.mxu0 0.0
        %1313 = vmatprep.subr.mxu0 0.0
        %1314 = vmatpush1.msra.mxu0 0.0
        %1315 = vmatprep.subr.mxu0 0.0
        %1316 = vmatpush1.msra.mxu0 0.0
        %1317 = vmatprep.subr.mxu0 0.0
        %1318 = vmatpush1.msra.mxu0 0.0
        %1319 = vmatprep.subr.mxu0 0.0
        %1320 = vmatpush1.msra.mxu0 0.0
        %1321 = vmatprep.subr.mxu0 0.0
        %1322 = vmatpush1.msra.mxu0 0.0
        %1323 = vmatprep.subr.mxu0 0.0
        %1324 = vmatpush1.msra.mxu0 0.0
        %1325 = vmatprep.subr.mxu0 0.0
        %1326 = vmatpush1.msra.mxu0 0.0
        %1327 = vmatprep.subr.mxu0 0.0
        %1328 = vmatpush1.msra.mxu0 0.0
        %1329 = vmatprep.subr.mxu0 0.0
        %1330 = vmatpush1.msra.mxu0 0.0
        %1331 = vmatprep.subr.mxu0 0.0
        %1332 = vmatpush1.msra.mxu0 0.0
        %1333 = vmatprep.subr.mxu0 0.0
        %1334 = vmatpush1.msra.mxu0 0.0
        %1335 = vmatprep.subr.mxu0 0.0
        %1336 = vmatpush1.msra.mxu0 0.0
        %1337 = vmatprep.subr.mxu0 0.0
        %1338 = vmatpush1.msra.mxu0 0.0
        %1339 = vmatprep.subr.mxu0 0.0
        %1340 = vmatpush1.msra.mxu0 0.0
        %1341 = vmatprep.subr.mxu0 0.0
        %1342 = vmatpush1.msra.mxu0 0.0
        %1343 = vmatprep.subr.mxu0 0.0
        %1344 = vmatpush1.msra.mxu0 0.0
        %1345 = vmatprep.subr.mxu0 0.0
        %1346 = vmatpush1.msra.mxu0 0.0
        %1347 = vmatprep.subr.mxu0 0.0
        %1348 = vmatpush1.msra.mxu0 0.0
        %1349 = vmatprep.subr.mxu0 0.0
        %1350 = vmatpush1.msra.mxu0 0.0
        %1351 = vmatprep.subr.mxu0 0.0
        %1352 = vmatpush1.msra.mxu0 0.0
        %1353 = vmatprep.subr.mxu0 0.0
        %1354 = vmatpush1.msra.mxu0 0.0
        %1355 = vmatprep.subr.mxu0 0.0
        %1356 = vmatpush1.msra.mxu0 0.0
        %1357 = vmatprep.subr.mxu0 0.0
        %1358 = vmatpush1.msra.mxu0 0.0
        %1359 = vmatprep.subr.mxu0 0.0
        %1360 = vmatpush1.msra.mxu0 0.0
        %1361 = vmatprep.subr.mxu0 0.0
        %1362 = vmatpush1.msra.mxu0 0.0
        %1363 = vmatprep.subr.mxu0 0.0
        %1364 = vmatpush1.msra.mxu0 0.0
        %1365 = vmatprep.subr.mxu0 0.0
        %1366 = vmatpush1.msra.mxu0 0.0
        %1367 = vmatprep.subr.mxu0 0.0
        %1368 = vmatpush1.msra.mxu0 0.0
        %1369 = vmatprep.subr.mxu0 0.0
        %1370 = vmatpush1.msra.mxu0 0.0
        %1371 = vmatprep.mubr.f32.mxu0 0.0
        %1372 = vmatmul.mubr.f32.gmra.mrb[0].mxu0 %v1305
        %v1373 = vpop.f32.mrb[0].mxu0
        %v1374 = vadd.f32 0.0, %v1373
        %v1375 = vpop.f32.mrb[0].mxu0
        %1376 = vdwg.mxu0
        %v1378 = vsel %vm735, %v1374, 0
        %1380 = vmatprep.subr.mxu0 0.0
        %1381 = vmatpush1.msra.mxu0 %v567
        %1382 = vmatprep.subr.mxu0 0.0
        %1383 = vmatpush1.msra.mxu0 %v568
        %1384 = vmatprep.subr.mxu0 0.0
        %1385 = vmatpush1.msra.mxu0 %v569
        %1386 = vmatprep.subr.mxu0 0.0
        %1387 = vmatpush1.msra.mxu0 %v570
        %1388 = vmatprep.subr.mxu0 0.0
        %1389 = vmatpush1.msra.mxu0 0.0
        %1390 = vmatprep.subr.mxu0 0.0
        %1391 = vmatpush1.msra.mxu0 0.0
        %1392 = vmatprep.subr.mxu0 0.0
        %1393 = vmatpush1.msra.mxu0 0.0
        %1394 = vmatprep.subr.mxu0 0.0
        %1395 = vmatpush1.msra.mxu0 0.0
        %1396 = vmatprep.subr.mxu0 0.0
        %1397 = vmatpush1.msra.mxu0 0.0
        %1398 = vmatprep.subr.mxu0 0.0
        %1399 = vmatpush1.msra.mxu0 0.0
        %1400 = vmatprep.subr.mxu0 0.0
        %1401 = vmatpush1.msra.mxu0 0.0
        %1402 = vmatprep.subr.mxu0 0.0
        %1403 = vmatpush1.msra.mxu0 0.0
        %1404 = vmatprep.subr.mxu0 0.0
        %1405 = vmatpush1.msra.mxu0 0.0
        %1406 = vmatprep.subr.mxu0 0.0
        %1407 = vmatpush1.msra.mxu0 0.0
        %1408 = vmatprep.subr.mxu0 0.0
        %1409 = vmatpush1.msra.mxu0 0.0
        %1410 = vmatprep.subr.mxu0 0.0
        %1411 = vmatpush1.msra.mxu0 0.0
        %1412 = vmatprep.subr.mxu0 0.0
        %1413 = vmatpush1.msra.mxu0 0.0
        %1414 = vmatprep.subr.mxu0 0.0
        %1415 = vmatpush1.msra.mxu0 0.0
        %1416 = vmatprep.subr.mxu0 0.0
        %1417 = vmatpush1.msra.mxu0 0.0
        %1418 = vmatprep.subr.mxu0 0.0
        %1419 = vmatpush1.msra.mxu0 0.0
        %1420 = vmatprep.subr.mxu0 0.0
        %1421 = vmatpush1.msra.mxu0 0.0
        %1422 = vmatprep.subr.mxu0 0.0
        %1423 = vmatpush1.msra.mxu0 0.0
        %1424 = vmatprep.subr.mxu0 0.0
        %1425 = vmatpush1.msra.mxu0 0.0
        %1426 = vmatprep.subr.mxu0 0.0
        %1427 = vmatpush1.msra.mxu0 0.0
        %1428 = vmatprep.subr.mxu0 0.0
        %1429 = vmatpush1.msra.mxu0 0.0
        %1430 = vmatprep.subr.mxu0 0.0
        %1431 = vmatpush1.msra.mxu0 0.0
        %1432 = vmatprep.subr.mxu0 0.0
        %1433 = vmatpush1.msra.mxu0 0.0
        %1434 = vmatprep.subr.mxu0 0.0
        %1435 = vmatpush1.msra.mxu0 0.0
        %1436 = vmatprep.subr.mxu0 0.0
        %1437 = vmatpush1.msra.mxu0 0.0
        %1438 = vmatprep.subr.mxu0 0.0
        %1439 = vmatpush1.msra.mxu0 0.0
        %1440 = vmatprep.subr.mxu0 0.0
        %1441 = vmatpush1.msra.mxu0 0.0
        %1442 = vmatprep.subr.mxu0 0.0
        %1443 = vmatpush1.msra.mxu0 0.0
        %1444 = vmatprep.mubr.f32.mxu0 0.0
        %1445 = vmatmul.mubr.f32.gmra.mrb[0].mxu0 %v1378
        %v1446 = vpop.f32.mrb[0].mxu0
        %v1447 = vadd.f32 0.0, %v1446
        %v1448 = vpop.f32.mrb[0].mxu0
        %1449 = vdwg.mxu0
        %v1450 = vadd.f32 %v1208, %v1447
        %1451 = vrot.lane.b32.xlu0 %v649, 32
        %v1452 = vpop.permute.xlu0 %1451
        %1453 = vrot.lane.b32.xlu0 %v731, 32
        %v1454 = vpop.permute.xlu0 %1453
        %v1455 = vsel %vm735, %v1452, 0
        %v1457 = vsel %vm735, %v1454, 0
        %1459 = vmatprep.subr.mxu0 0.0
        %1460 = vmatpush1.xpose.msra.mxu0 %v1457
        %1461 = vmatprep.subr.mxu0 0.0
        %1462 = vmatpush1.xpose.msra.mxu0 0.0
        %1463 = vmatprep.subr.mxu0 0.0
        %1464 = vmatpush1.xpose.msra.mxu0 0.0
        %1465 = vmatprep.subr.mxu0 0.0
        %1466 = vmatpush1.xpose.msra.mxu0 0.0
        %1467 = vmatprep.subr.mxu0 0.0
        %1468 = vmatpush1.xpose.msra.mxu0 0.0
        %1469 = vmatprep.subr.mxu0 0.0
        %1470 = vmatpush1.xpose.msra.mxu0 0.0
        %1471 = vmatprep.subr.mxu0 0.0
        %1472 = vmatpush1.xpose.msra.mxu0 0.0
        %1473 = vmatprep.subr.mxu0 0.0
        %1474 = vmatpush1.xpose.msra.mxu0 0.0
        %1475 = vmatprep.subr.mxu0 0.0
        %1476 = vmatpush1.xpose.msra.mxu0 0.0
        %1477 = vmatprep.subr.mxu0 0.0
        %1478 = vmatpush1.xpose.msra.mxu0 0.0
        %1479 = vmatprep.subr.mxu0 0.0
        %1480 = vmatpush1.xpose.msra.mxu0 0.0
        %1481 = vmatprep.subr.mxu0 0.0
        %1482 = vmatpush1.xpose.msra.mxu0 0.0
        %1483 = vmatprep.subr.mxu0 0.0
        %1484 = vmatpush1.xpose.msra.mxu0 0.0
        %1485 = vmatprep.subr.mxu0 0.0
        %1486 = vmatpush1.xpose.msra.mxu0 0.0
        %1487 = vmatprep.subr.mxu0 0.0
        %1488 = vmatpush1.xpose.msra.mxu0 0.0
        %1489 = vmatprep.subr.mxu0 0.0
        %1490 = vmatpush1.xpose.msra.mxu0 0.0
        %1491 = vmatprep.subr.mxu0 0.0
        %1492 = vmatpush1.xpose.msra.mxu0 0.0
        %1493 = vmatprep.subr.mxu0 0.0
        %1494 = vmatpush1.xpose.msra.mxu0 0.0
        %1495 = vmatprep.subr.mxu0 0.0
        %1496 = vmatpush1.xpose.msra.mxu0 0.0
        %1497 = vmatprep.subr.mxu0 0.0
        %1498 = vmatpush1.xpose.msra.mxu0 0.0
        %1499 = vmatprep.subr.mxu0 0.0
        %1500 = vmatpush1.xpose.msra.mxu0 0.0
        %1501 = vmatprep.subr.mxu0 0.0
        %1502 = vmatpush1.xpose.msra.mxu0 0.0
        %1503 = vmatprep.subr.mxu0 0.0
        %1504 = vmatpush1.xpose.msra.mxu0 0.0
        %1505 = vmatprep.subr.mxu0 0.0
        %1506 = vmatpush1.xpose.msra.mxu0 0.0
        %1507 = vmatprep.subr.mxu0 0.0
        %1508 = vmatpush1.xpose.msra.mxu0 0.0
        %1509 = vmatprep.subr.mxu0 0.0
        %1510 = vmatpush1.xpose.msra.mxu0 0.0
        %1511 = vmatprep.subr.mxu0 0.0
        %1512 = vmatpush1.xpose.msra.mxu0 0.0
        %1513 = vmatprep.subr.mxu0 0.0
        %1514 = vmatpush1.xpose.msra.mxu0 0.0
        %1515 = vmatprep.subr.mxu0 0.0
        %1516 = vmatpush1.xpose.msra.mxu0 0.0
        %1517 = vmatprep.subr.mxu0 0.0
        %1518 = vmatpush1.xpose.msra.mxu0 0.0
        %1519 = vmatprep.subr.mxu0 0.0
        %1520 = vmatpush1.xpose.msra.mxu0 0.0
        %1521 = vmatprep.subr.mxu0 0.0
        %1522 = vmatpush1.xpose.msra.mxu0 0.0
        %1523 = vmatprep.mubr.f32.mxu0 0.0
        %1524 = vmatmul.mubr.f32.gmra.mrb[0].mxu0 %v1455
        %v1525 = vpop.f32.mrb[0].mxu0
        %v1526 = vadd.f32 0.0, %v1525
        %v1527 = vpop.f32.mrb[0].mxu0
        %1528 = vdwg.mxu0
        %v1529 = vmul.f32 %v1526, 0.17677669
        %v1530 = vsel %vm813, %v1529, -inf
        %1531 = vmax.xlane.f32.xlu0 %v1530
        %v1532 = vpop.xlane.xlu0 %1531
        %v1533 = vsub.f32 %v1529, %v1532
        %v1534 = vmul.f32 %v1533, 1.442695
        %v1535 = vpow.pop %v1534
        %v1536 = vsel %vm813, %v1535, 0.0
        %1537 = vadd.xlane.f32.xlu0 %v1536
        %v1538 = vpop.xlane.xlu0 %1537
        %v1539 = vrcp.pop %v1538
        %v1540 = vmul.f32 %v1535, %v1539
        %1541 = vrot.lane.b32.xlu0 %v733, 32
        %v1542 = vpop.permute.xlu0 %1541
        %v1545 = vsel %vm813, %v1540, 0
        %1547 = vmatprep.subr.mxu0 0.0
        %1548 = vmatpush1.msra.mxu0 %v1542
        %1549 = vmatprep.subr.mxu0 0.0
        %1550 = vmatpush1.msra.mxu0 0.0
        %1551 = vmatprep.subr.mxu0 0.0
        %1552 = vmatpush1.msra.mxu0 0.0
        %1553 = vmatprep.subr.mxu0 0.0
        %1554 = vmatpush1.msra.mxu0 0.0
        %1555 = vmatprep.subr.mxu0 0.0
        %1556 = vmatpush1.msra.mxu0 0.0
        %1557 = vmatprep.subr.mxu0 0.0
        %1558 = vmatpush1.msra.mxu0 0.0
        %1559 = vmatprep.subr.mxu0 0.0
        %1560 = vmatpush1.msra.mxu0 0.0
        %1561 = vmatprep.subr.mxu0 0.0
        %1562 = vmatpush1.msra.mxu0 0.0
        %1563 = vmatprep.subr.mxu0 0.0
        %1564 = vmatpush1.msra.mxu0 0.0
        %1565 = vmatprep.subr.mxu0 0.0
        %1566 = vmatpush1.msra.mxu0 0.0
        %1567 = vmatprep.subr.mxu0 0.0
        %1568 = vmatpush1.msra.mxu0 0.0
        %1569 = vmatprep.subr.mxu0 0.0
        %1570 = vmatpush1.msra.mxu0 0.0
        %1571 = vmatprep.subr.mxu0 0.0
        %1572 = vmatpush1.msra.mxu0 0.0
        %1573 = vmatprep.subr.mxu0 0.0
        %1574 = vmatpush1.msra.mxu0 0.0
        %1575 = vmatprep.subr.mxu0 0.0
        %1576 = vmatpush1.msra.mxu0 0.0
        %1577 = vmatprep.subr.mxu0 0.0
        %1578 = vmatpush1.msra.mxu0 0.0
        %1579 = vmatprep.subr.mxu0 0.0
        %1580 = vmatpush1.msra.mxu0 0.0
        %1581 = vmatprep.subr.mxu0 0.0
        %1582 = vmatpush1.msra.mxu0 0.0
        %1583 = vmatprep.subr.mxu0 0.0
        %1584 = vmatpush1.msra.mxu0 0.0
        %1585 = vmatprep.subr.mxu0 0.0
        %1586 = vmatpush1.msra.mxu0 0.0
        %1587 = vmatprep.subr.mxu0 0.0
        %1588 = vmatpush1.msra.mxu0 0.0
        %1589 = vmatprep.subr.mxu0 0.0
        %1590 = vmatpush1.msra.mxu0 0.0
        %1591 = vmatprep.subr.mxu0 0.0
        %1592 = vmatpush1.msra.mxu0 0.0
        %1593 = vmatprep.subr.mxu0 0.0
        %1594 = vmatpush1.msra.mxu0 0.0
        %1595 = vmatprep.subr.mxu0 0.0
        %1596 = vmatpush1.msra.mxu0 0.0
        %1597 = vmatprep.subr.mxu0 0.0
        %1598 = vmatpush1.msra.mxu0 0.0
        %1599 = vmatprep.subr.mxu0 0.0
        %1600 = vmatpush1.msra.mxu0 0.0
        %1601 = vmatprep.subr.mxu0 0.0
        %1602 = vmatpush1.msra.mxu0 0.0
        %1603 = vmatprep.subr.mxu0 0.0
        %1604 = vmatpush1.msra.mxu0 0.0
        %1605 = vmatprep.subr.mxu0 0.0
        %1606 = vmatpush1.msra.mxu0 0.0
        %1607 = vmatprep.subr.mxu0 0.0
        %1608 = vmatpush1.msra.mxu0 0.0
        %1609 = vmatprep.subr.mxu0 0.0
        %1610 = vmatpush1.msra.mxu0 0.0
        %1611 = vmatprep.mubr.f32.mxu0 0.0
        %1612 = vmatmul.mubr.f32.gmra.mrb[0].mxu0 %v1545
        %v1613 = vpop.f32.mrb[0].mxu0
        %v1614 = vadd.f32 0.0, %v1613
        %v1615 = vpop.f32.mrb[0].mxu0
        %1616 = vdwg.mxu0
        %v1618 = vsel %vm735, %v1614, 0
        %1620 = vmatprep.subr.mxu0 0.0
        %1621 = vmatpush1.msra.mxu0 %v571
        %1622 = vmatprep.subr.mxu0 0.0
        %1623 = vmatpush1.msra.mxu0 %v572
        %1624 = vmatprep.subr.mxu0 0.0
        %1625 = vmatpush1.msra.mxu0 %v573
        %1626 = vmatprep.subr.mxu0 0.0
        %1627 = vmatpush1.msra.mxu0 %v574
        %1628 = vmatprep.subr.mxu0 0.0
        %1629 = vmatpush1.msra.mxu0 0.0
        %1630 = vmatprep.subr.mxu0 0.0
        %1631 = vmatpush1.msra.mxu0 0.0
        %1632 = vmatprep.subr.mxu0 0.0
        %1633 = vmatpush1.msra.mxu0 0.0
        %1634 = vmatprep.subr.mxu0 0.0
        %1635 = vmatpush1.msra.mxu0 0.0
        %1636 = vmatprep.subr.mxu0 0.0
        %1637 = vmatpush1.msra.mxu0 0.0
        %1638 = vmatprep.subr.mxu0 0.0
        %1639 = vmatpush1.msra.mxu0 0.0
        %1640 = vmatprep.subr.mxu0 0.0
        %1641 = vmatpush1.msra.mxu0 0.0
        %1642 = vmatprep.subr.mxu0 0.0
        %1643 = vmatpush1.msra.mxu0 0.0
        %1644 = vmatprep.subr.mxu0 0.0
        %1645 = vmatpush1.msra.mxu0 0.0
        %1646 = vmatprep.subr.mxu0 0.0
        %1647 = vmatpush1.msra.mxu0 0.0
        %1648 = vmatprep.subr.mxu0 0.0
        %1649 = vmatpush1.msra.mxu0 0.0
        %1650 = vmatprep.subr.mxu0 0.0
        %1651 = vmatpush1.msra.mxu0 0.0
        %1652 = vmatprep.subr.mxu0 0.0
        %1653 = vmatpush1.msra.mxu0 0.0
        %1654 = vmatprep.subr.mxu0 0.0
        %1655 = vmatpush1.msra.mxu0 0.0
        %1656 = vmatprep.subr.mxu0 0.0
        %1657 = vmatpush1.msra.mxu0 0.0
        %1658 = vmatprep.subr.mxu0 0.0
        %1659 = vmatpush1.msra.mxu0 0.0
        %1660 = vmatprep.subr.mxu0 0.0
        %1661 = vmatpush1.msra.mxu0 0.0
        %1662 = vmatprep.subr.mxu0 0.0
        %1663 = vmatpush1.msra.mxu0 0.0
        %1664 = vmatprep.subr.mxu0 0.0
        %1665 = vmatpush1.msra.mxu0 0.0
        %1666 = vmatprep.subr.mxu0 0.0
        %1667 = vmatpush1.msra.mxu0 0.0
        %1668 = vmatprep.subr.mxu0 0.0
        %1669 = vmatpush1.msra.mxu0 0.0
        %1670 = vmatprep.subr.mxu0 0.0
        %1671 = vmatpush1.msra.mxu0 0.0
        %1672 = vmatprep.subr.mxu0 0.0
        %1673 = vmatpush1.msra.mxu0 0.0
        %1674 = vmatprep.subr.mxu0 0.0
        %1675 = vmatpush1.msra.mxu0 0.0
        %1676 = vmatprep.subr.mxu0 0.0
        %1677 = vmatpush1.msra.mxu0 0.0
        %1678 = vmatprep.subr.mxu0 0.0
        %1679 = vmatpush1.msra.mxu0 0.0
        %1680 = vmatprep.subr.mxu0 0.0
        %1681 = vmatpush1.msra.mxu0 0.0
        %1682 = vmatprep.subr.mxu0 0.0
        %1683 = vmatpush1.msra.mxu0 0.0
        %1684 = vmatprep.mubr.f32.mxu0 0.0
        %1685 = vmatmul.mubr.f32.gmra.mrb[0].mxu0 %v1618
        %v1686 = vpop.f32.mrb[0].mxu0
        %v1687 = vadd.f32 0.0, %v1686
        %v1688 = vpop.f32.mrb[0].mxu0
        %1689 = vdwg.mxu0
        %v1690 = vadd.f32 %v1450, %v1687
        %v1691 = vld [vmem:[%s7] sm:$0x1]
        %v1693 = vlaneseq
        %v1694 = vshrl.u32 %v1693, 7
        %v1695 = vsub.s32 0, %v1694
        %v1696 = vrot.slane %v1691, %v1695
        %v1698 = vadd.f32 %v1690, %v1696
        %v1699 = vadd.f32 %v509, %v1698
        %v1700 = vld [vmem:[%s8] sm:$0x1]
        %v1701 = vld [vmem:[%s9] sm:$0x1]
        %1702 = vadd.xlane.f32.xlu0 %v1699
        %v1703 = vpop.xlane.xlu0 %1702
        %v1704 = vrcp.pop 128.0
        %v1705 = vmul.f32 %v1703, %v1704
        %v1706 = vsub.f32 %v1699, %v1705
        %v1707 = vmul.f32 %v1706, %v1706
        %1708 = vadd.xlane.f32.xlu0 %v1707
        %v1709 = vpop.xlane.xlu0 %1708
        %v1710 = vmul.f32 %v1709, %v1704
        %v1711 = vadd.f32 %v1710, 1e-05
        %v1712 = vrsqrt.pop %v1711
        %v1713 = vmul.f32 %v1706, %v1712
        %v1715 = vlaneseq
        %v1716 = vshrl.u32 %v1715, 7
        %v1717 = vsub.s32 0, %v1716
        %v1718 = vrot.slane %v1700, %v1717
        %v1720 = vmul.f32 %v1713, %v1718
        %v1722 = vlaneseq
        %v1723 = vshrl.u32 %v1722, 7
        %v1724 = vsub.s32 0, %v1723
        %v1725 = vrot.slane %v1701, %v1724
        %v1727 = vadd.f32 %v1720, %v1725
        %v1728 = vadd.f32 %v509, %v1727
        %v1729 = vld [vmem:[%s10] sm:$0x1]
        %v1730 = vld [vmem:[%s11] sm:$0x1]
        %1731 = vadd.xlane.f32.xlu0 %v1728
        %v1732 = vpop.xlane.xlu0 %1731
        %v1733 = vmul.f32 %v1732, %v1704
        %v1734 = vsub.f32 %v1728, %v1733
        %v1735 = vmul.f32 %v1734, %v1734
        %1736 = vadd.xlane.f32.xlu0 %v1735
        %v1737 = vpop.xlane.xlu0 %1736
        %v1738 = vmul.f32 %v1737, %v1704
        %v1739 = vadd.f32 %v1738, 1e-05
        %v1740 = vrsqrt.pop %v1739
        %v1741 = vmul.f32 %v1734, %v1740
        %v1743 = vlaneseq
        %v1744 = vshrl.u32 %v1743, 7
        %v1745 = vsub.s32 0, %v1744
        %v1746 = vrot.slane %v1729, %v1745
        %v1748 = vmul.f32 %v1741, %v1746
        %v1750 = vlaneseq
        %v1751 = vshrl.u32 %v1750, 7
        %v1752 = vsub.s32 0, %v1751
        %v1753 = vrot.slane %v1730, %v1752
        %v1755 = vadd.f32 %v1748, %v1753
        %1756 = vst [vmem:[%s508] sm:$0xff] %v1755
        %s1757 = sand.u32 %s303, 1
        %s1758 = scalar_lea.sflag [#allocation4], %s1757
        %s1759 = sand.u32 %s303, 1
        %s1760 = smul.addr %s1759, 8
        %s1761 = scalar_lea.vmem [#allocation11], %s1760
        // Predicated region
        $region89: #{tpu_custom_call.1} parent=67 // pred_check
          %p1762 = pneg %p313
        $region90: #{tpu_custom_call.1} parent=67 // pred_check_branch
          %1764 = sbr.rel (%p1762) target = $region92
        $region91: #{tpu_custom_call.1} parent=67 // pred_region
          %s1766 = ssub.s32 128, 128
          %1767 = vsyncadd %s1758, %s1766
          %s1768 = smul.addr %s33, 128
          %s1769 = scalar_lea.hbm %s12, %s1768
          %s1771 = sshll.u32 %s1761, 4
          %s1772 = int_to_ptr.vmem [resolvable:$true] %s1771
          %1774 = dma.vmem_to_hbm [thread:$0]  %s1772, 128, %s1769, %s1758
        $region92: #{tpu_custom_call.1} parent=67 // pred_fallthru
          _
      $region68: #{tpu_custom_call.1} parent=5 // pred_fallthru
        _
      %p1775 = scmp.le.s32.totalorder 2, %s28
      // Predicated region
      $region93: #{tpu_custom_call.1} parent=5 // pred_check
        %p1776 = pneg %p1775
      $region94: #{tpu_custom_call.1} parent=5 // pred_check_branch
        %1778 = sbr.rel (%p1776) target = $region96
      $region95: #{tpu_custom_call.1} parent=5 // pred_region
        %s1779 = ssub.s32 %s28, 2
        // Predicated region
        $region97: #{tpu_custom_call.1} parent=95 // pred_check
          %p1780 = pneg %p319
        $region98: #{tpu_custom_call.1} parent=95 // pred_check_branch
          %1782 = sbr.rel (%p1780) target = $region100
        $region99: #{tpu_custom_call.1} parent=95 // pred_region
          %s1783 = sand.u32 %s304, 1
          %s1784 = scalar_lea.sflag [#allocation4], %s1783
          %s1785 = sand.u32 %s304, 1
          %s1786 = smul.addr %s1785, 8
          %s1787 = scalar_lea.vmem [#allocation11], %s1786
          %1788 = dma.done %s1784, 128
        $region100: #{tpu_custom_call.1} parent=95 // pred_fallthru
          _
      $region96: #{tpu_custom_call.1} parent=5 // pred_fallthru
        _
    $region6: #{tpu_custom_call.1} parent=1 // loop_footer
      %s32 = sadd.s32 1, %s28
    $region7: #{tpu_custom_call.1} parent=1 // loop_footer_branch
      %27 = sbr.rel target = $region3
    $region8: #{tpu_custom_call.1} parent=1 // loop_exit
      _
    %1789 = vsyncpa [#allocation3], 1
    %s1790 = scalar_lea.sflag [#allocation3], 1
    %1791 = vsyncpa %s1790, 1
    %1792 = vsyncpa [#allocation6], 1
    %s1793 = scalar_lea.sflag [#allocation6], 1
    %1794 = vsyncpa %s1793, 1
    %1795 = vsyncpa [#allocation9], 1
    %1796 = vsyncpa [#allocation4], 1
    %s1797 = scalar_lea.sflag [#allocation4], 1
    %1798 = vsyncpa %s1797, 1

</llo_original>
